<compile_context>
chip_gen: v5e
topology: v5e:2x2
jax: 0.10.0
libtpu: 0.0.40
codegen_flags: <defaults>
</compile_context>

<pallas_src>
import jax
import jax.numpy as jnp
from jax.experimental import pallas as pl

VOCAB = 50
EMBED = 32      # must equal HIDDEN (tied projection weight)
HIDDEN = 32
LAYERS = 2
BATCH = 2
SEQ = 8


def lstm_lm_kernel(g0_ref, whh0_ref, wih1_ref, whh1_ref, b1_ref,
                   wproj_ref, bproj_ref, h0_ref, c0_ref,
                   logits_ref, hn_ref, cn_ref):
    """Single invocation (no grid). Runs the full T-step, 2-layer LSTM recurrence in-kernel.

    g0_ref:     (T, B, 4H)  precomputed layer-0 input projection (bias folded in)
    whh0_ref:   (H, 4H)     layer-0 recurrent weight (transposed)
    wih1_ref:   (H, 4H)     layer-1 input weight (transposed)
    whh1_ref:   (H, 4H)     layer-1 recurrent weight (transposed)
    b1_ref:     (1, 4H)     layer-1 summed bias
    wproj_ref:  (H, Vpad)   tied projection (zero-padded to lane-dense Vpad)
    bproj_ref:  (1, Vpad)
    h0_ref/c0_ref: (LAYERS, B, H) initial state
    logits_ref: (T*B, Vpad) time-major logits ; hn_ref/cn_ref: (LAYERS, B, H)
    """
    T = g0_ref.shape[0]
    B = h0_ref.shape[1]
    H = h0_ref.shape[2]

    # Hoist weight reads / bias broadcast out of the unrolled loop (JAX does not CSE these).
    whh0 = whh0_ref[...]                                   # (H, 4H)
    wih1 = wih1_ref[...]                                   # (H, 4H)
    whh1 = whh1_ref[...]                                   # (H, 4H)
    b1 = jnp.broadcast_to(b1_ref[...], (B, 4 * H))         # (B, 4H), broadcast once

    h0 = h0_ref[0]
    c0 = c0_ref[0]
    h1 = h0_ref[1]
    c1 = c0_ref[1]

    def gate_combine(gates, c_prev):
        # PyTorch gate order: i, f, g, o.  Apply sigmoid/tanh over the full (B, 4H) vreg
        # once each (3 EUP pushes incl. tanh(c_new) instead of 5), then take lane slices.
        sig = jax.nn.sigmoid(gates)                        # full-width EUP pass
        tnh = jnp.tanh(gates)                              # full-width EUP pass
        i = sig[:, 0 * H:1 * H]
        f = sig[:, 1 * H:2 * H]
        g = tnh[:, 2 * H:3 * H]
        o = sig[:, 3 * H:4 * H]
        c_new = f * c_prev + i * g
        h_new = o * jnp.tanh(c_new)
        return h_new, c_new

    h1_hist = []                                           # h1_t values kept in vregs

    # ---- Recurrence: fully unrolled static loop (T is a small trace-time constant).
    for t in range(T):
        # Layer-1 recurrent product depends only on h1_{t-1}: issue it first so its MXU
        # push/pop overlaps layer-0's gate computation.
        r1 = jnp.dot(h1, whh1, preferred_element_type=jnp.float32)          # (B, 4H)

        # Layer 0: input-projection term precomputed (gathered table); only the recurrent
        # matmul is on the serial chain.
        gates0 = g0_ref[t] + jnp.dot(h0, whh0, preferred_element_type=jnp.float32)
        h0, c0 = gate_combine(gates0, c0)

        # Layer 1: h0_t-dependent product added to the already-issued recurrent term.
        gates1 = jnp.dot(h0, wih1, preferred_element_type=jnp.float32) + r1 + b1
        h1, c1 = gate_combine(gates1, c1)

        h1_hist.append(h1)                                 # stays in vregs, no VMEM store

    # ---- Epilogue: single lane-dense tied projection for all timesteps at once.
    h1_all = jnp.concatenate(h1_hist, axis=0)              # (T*B, H), time-major rows
    logits_ref[...] = (jnp.dot(h1_all, wproj_ref[...],
                               preferred_element_type=jnp.float32) + bproj_ref[...])

    hn_ref[0] = h0
    hn_ref[1] = h1
    cn_ref[0] = c0
    cn_ref[1] = c1


def lstm_language_model_forward(x_tokens, hidden, params):
    """Equivalent of LSTMLanguageModel.forward(x, hidden) -> (logits, (h_n, c_n))."""
    h0, c0 = hidden
    embed_w = params["embed"]                              # (V, E)
    V, E = embed_w.shape
    H = params["whh0"].shape[1]
    L = h0.shape[0]
    assert E == H, "weight tying (proj.weight = embed.weight) requires embed_dim == hidden_dim"

    B, T = x_tokens.shape

    # Layer-0 input projection as a gathered table (exact: gather commutes with the matmul).
    b0 = (params["bih0"] + params["bhh0"]).reshape(1, 4 * H).astype(jnp.float32)
    table = (embed_w.astype(jnp.float32) @ params["wih0"].T.astype(jnp.float32)) + b0   # (V, 4H)
    g0_all = jnp.take(table, x_tokens, axis=0)             # (B, T, 4H)
    g0_all = jnp.transpose(g0_all, (1, 0, 2))              # (T, B, 4H), time-major

    # Pre-transpose remaining weights so the kernel does plain (rows, in) @ (in, cols) matmuls.
    whh0_t = params["whh0"].T.astype(jnp.float32)          # (H, 4H)
    wih1_t = params["wih1"].T.astype(jnp.float32)          # (H, 4H)
    whh1_t = params["whh1"].T.astype(jnp.float32)          # (H, 4H)
    b1 = (params["bih1"] + params["bhh1"]).reshape(1, 4 * H).astype(jnp.float32)

    # Tied projection, zero-padded to a lane-dense width (V=50 -> 128).
    VPAD = pl.cdiv(V, 128) * 128
    wproj_pad = jnp.zeros((E, VPAD), jnp.float32).at[:, :V].set(embed_w.T)
    bproj_pad = jnp.zeros((1, VPAD), jnp.float32).at[:, :V].set(
        params["bproj"].reshape(1, V))

    out_shapes = (
        jax.ShapeDtypeStruct((T * B, VPAD), jnp.float32),  # logits (time-major, padded V)
        jax.ShapeDtypeStruct((L, B, H), jnp.float32),      # h_n
        jax.ShapeDtypeStruct((L, B, H), jnp.float32),      # c_n
    )

    # Advisory cost hint so XLA overlaps the surrounding gather/transpose/slice with the call.
    H4 = 4 * H
    flops = 2 * (T * 3 * B * H * H4 + T * B * H * VPAD)
    transcendentals = 5 * T * L * B * H
    in_bytes = 4 * (T * B * H4 + 3 * H * H4 + H4 + H * VPAD + VPAD + 2 * L * B * H)
    out_bytes = 4 * (T * B * VPAD + 2 * L * B * H)
    cost = pl.CostEstimate(flops=flops, transcendentals=transcendentals,
                           bytes_accessed=in_bytes + out_bytes)

    logits_flat, hn, cn = pl.pallas_call(
        lstm_lm_kernel,
        out_shape=out_shapes,
        cost_estimate=cost,
    )(g0_all, whh0_t, wih1_t, whh1_t, b1, wproj_pad, bproj_pad, h0, c0)

    logits = logits_flat.reshape(T, B, VPAD)[:, :, :V].transpose(1, 0, 2)   # (B, T, V)
    return logits, (hn, cn)


def reference_forward(x_tokens, hidden, params):
    """Pure-JAX reference (matches eval-mode PyTorch semantics) for verification."""
    emb = jnp.take(params["embed"], x_tokens, axis=0)
    h, c = hidden

    def lstm_layer(inp, h0, c0, wih, whh, bih, bhh):
        def step(carry, x):
            hh, cc = carry
            gates = x @ wih.T + hh @ whh.T + bih + bhh
            i, f, g, o = jnp.split(gates, 4, axis=-1)
            c_new = jax.nn.sigmoid(f) * cc + jax.nn.sigmoid(i) * jnp.tanh(g)
            h_new = jax.nn.sigmoid(o) * jnp.tanh(c_new)
            return (h_new, c_new), h_new
        (hT, cT), ys = jax.lax.scan(step, (h0, c0), jnp.transpose(inp, (1, 0, 2)))
        return jnp.transpose(ys, (1, 0, 2)), hT, cT

    out0, h0T, c0T = lstm_layer(emb, h[0], c[0], params["wih0"], params["whh0"],
                                params["bih0"], params["bhh0"])
    out1, h1T, c1T = lstm_layer(out0, h[1], c[1], params["wih1"], params["whh1"],
                                params["bih1"], params["bhh1"])
    logits = out1 @ params["embed"].T + params["bproj"]
    return logits, (jnp.stack([h0T, h1T]), jnp.stack([c0T, c1T]))


def make_params(key):
    ks = jax.random.split(key, 11)
    s = 1.0 / jnp.sqrt(jnp.float32(HIDDEN))
    u = lambda k, shape: jax.random.uniform(k, shape, jnp.float32, -s, s)
    return {
        "embed": jax.random.normal(ks[0], (VOCAB, EMBED), jnp.float32) * 0.1,
        "wih0": u(ks[1], (4 * HIDDEN, EMBED)),
        "whh0": u(ks[2], (4 * HIDDEN, HIDDEN)),
        "bih0": u(ks[3], (4 * HIDDEN,)),
        "bhh0": u(ks[4], (4 * HIDDEN,)),
        "wih1": u(ks[5], (4 * HIDDEN, HIDDEN)),
        "whh1": u(ks[6], (4 * HIDDEN, HIDDEN)),
        "bih1": u(ks[7], (4 * HIDDEN,)),
        "bhh1": u(ks[8], (4 * HIDDEN,)),
        "bproj": jnp.zeros((VOCAB,), jnp.float32),   # proj.bias.data.zero_()
    }


if __name__ == "__main__":
    key = jax.random.PRNGKey(0)
    pkey, xkey = jax.random.split(key)
    params = make_params(pkey)

    x_tokens = jax.random.randint(xkey, (BATCH, SEQ), 0, VOCAB, dtype=jnp.int32)
    # init_hidden(batchsz): zeros of shape (layers, B, H)
    h0 = jnp.zeros((LAYERS, BATCH, HIDDEN), jnp.float32)
    c0 = jnp.zeros((LAYERS, BATCH, HIDDEN), jnp.float32)

    logits, (hn, cn) = lstm_language_model_forward(x_tokens, (h0, c0), params)
    jax.block_until_ready((logits, hn, cn))

    ref_logits, (ref_hn, ref_cn) = reference_forward(x_tokens, (h0, c0), params)
    assert logits.shape == (BATCH, SEQ, VOCAB)
    assert hn.shape == (LAYERS, BATCH, HIDDEN) and cn.shape == (LAYERS, BATCH, HIDDEN)
    assert jnp.allclose(logits, ref_logits, rtol=1e-4, atol=1e-4)
    assert jnp.allclose(hn, ref_hn, rtol=1e-4, atol=1e-4)
    assert jnp.allclose(cn, ref_cn, rtol=1e-4, atol=1e-4)

    print("KERNEL_OK")
</pallas_src>

<mosaic_0001>
module attributes {stable_mosaic.version = 11 : i64} {
  func.func @lstm_lm_kernel(%arg0: memref<8x2x128xf32, #tpu.memory_space<vmem>>, %arg1: memref<32x128xf32, #tpu.memory_space<vmem>>, %arg2: memref<32x128xf32, #tpu.memory_space<vmem>>, %arg3: memref<32x128xf32, #tpu.memory_space<vmem>>, %arg4: memref<1x128xf32, #tpu.memory_space<vmem>>, %arg5: memref<32x128xf32, #tpu.memory_space<vmem>>, %arg6: memref<1x128xf32, #tpu.memory_space<vmem>>, %arg7: memref<2x2x32xf32, #tpu.memory_space<vmem>>, %arg8: memref<2x2x32xf32, #tpu.memory_space<vmem>>, %arg9: memref<16x128xf32, #tpu.memory_space<vmem>>, %arg10: memref<2x2x32xf32, #tpu.memory_space<vmem>>, %arg11: memref<2x2x32xf32, #tpu.memory_space<vmem>>) attributes {dimension_semantics = [], scalar_prefetch = 0 : i64, scratch_operands = 0 : i64, tpu.core_type = #tpu.core_type<tc>} {
    %c0 = arith.constant 0 : index
    %c0_0 = arith.constant 0 : index
    %0 = vector.load %arg1[%c0, %c0_0] : memref<32x128xf32, #tpu.memory_space<vmem>>, vector<32x128xf32>
    %c0_1 = arith.constant 0 : index
    %c0_2 = arith.constant 0 : index
    %1 = vector.load %arg2[%c0_1, %c0_2] : memref<32x128xf32, #tpu.memory_space<vmem>>, vector<32x128xf32>
    %c0_3 = arith.constant 0 : index
    %c0_4 = arith.constant 0 : index
    %2 = vector.load %arg3[%c0_3, %c0_4] : memref<32x128xf32, #tpu.memory_space<vmem>>, vector<32x128xf32>
    %c0_5 = arith.constant 0 : index
    %c0_6 = arith.constant 0 : index
    %3 = vector.load %arg4[%c0_5, %c0_6] : memref<1x128xf32, #tpu.memory_space<vmem>>, vector<1x128xf32>
    %4 = vector.shape_cast %3 : vector<1x128xf32> to vector<1x128xf32>
    %5 = vector.broadcast %4 : vector<1x128xf32> to vector<2x128xf32>
    %c0_7 = arith.constant 0 : index
    %c0_8 = arith.constant 0 : index
    %c0_9 = arith.constant 0 : index
    %6 = vector.load %arg7[%c0_7, %c0_8, %c0_9] : memref<2x2x32xf32, #tpu.memory_space<vmem>>, vector<1x2x32xf32>
    %7 = vector.shape_cast %6 : vector<1x2x32xf32> to vector<2x32xf32>
    %c0_10 = arith.constant 0 : index
    %c0_11 = arith.constant 0 : index
    %c0_12 = arith.constant 0 : index
    %8 = vector.load %arg8[%c0_10, %c0_11, %c0_12] : memref<2x2x32xf32, #tpu.memory_space<vmem>>, vector<1x2x32xf32>
    %9 = vector.shape_cast %8 : vector<1x2x32xf32> to vector<2x32xf32>
    %c1 = arith.constant 1 : index
    %c0_13 = arith.constant 0 : index
    %c0_14 = arith.constant 0 : index
    %10 = vector.load %arg7[%c1, %c0_13, %c0_14] : memref<2x2x32xf32, #tpu.memory_space<vmem>>, vector<1x2x32xf32>
    %11 = vector.shape_cast %10 : vector<1x2x32xf32> to vector<2x32xf32>
    %c1_15 = arith.constant 1 : index
    %c0_16 = arith.constant 0 : index
    %c0_17 = arith.constant 0 : index
    %12 = vector.load %arg8[%c1_15, %c0_16, %c0_17] : memref<2x2x32xf32, #tpu.memory_space<vmem>>, vector<1x2x32xf32>
    %13 = vector.shape_cast %12 : vector<1x2x32xf32> to vector<2x32xf32>
    %cst = arith.constant dense<0.000000e+00> : vector<2x128xf32>
    %14 = tpu.matmul %11, %2, %cst {dimension_numbers = #tpu.dot_dimension_numbers<[1], [0], [0], [1], [0, 0, 1, 1], [], []>} : vector<2x32xf32>, vector<32x128xf32>, vector<2x128xf32> -> vector<2x128xf32>
    %c0_18 = arith.constant 0 : index
    %c0_19 = arith.constant 0 : index
    %c0_20 = arith.constant 0 : index
    %15 = vector.load %arg0[%c0_18, %c0_19, %c0_20] : memref<8x2x128xf32, #tpu.memory_space<vmem>>, vector<1x2x128xf32>
    %16 = vector.shape_cast %15 : vector<1x2x128xf32> to vector<2x128xf32>
    %cst_21 = arith.constant dense<0.000000e+00> : vector<2x128xf32>
    %17 = tpu.matmul %7, %0, %cst_21 {dimension_numbers = #tpu.dot_dimension_numbers<[1], [0], [0], [1], [0, 0, 1, 1], [], []>} : vector<2x32xf32>, vector<32x128xf32>, vector<2x128xf32> -> vector<2x128xf32>
    %18 = arith.addf %16, %17 : vector<2x128xf32>
    %19 = arith.negf %18 : vector<2x128xf32>
    %20 = math.exp %19 : vector<2x128xf32>
    %cst_22 = arith.constant 1.000000e+00 : f32
    %21 = vector.broadcast %cst_22 : f32 to vector<2x128xf32>
    %22 = arith.addf %21, %20 : vector<2x128xf32>
    %23 = arith.divf %21, %22 : vector<2x128xf32>
    %24 = math.tanh %18 : vector<2x128xf32>
    %25 = vector.extract_strided_slice %23 {offsets = [0, 0], sizes = [2, 32], strides = [1, 1]} : vector<2x128xf32> to vector<2x32xf32>
    %26 = vector.extract_strided_slice %23 {offsets = [0, 32], sizes = [2, 32], strides = [1, 1]} : vector<2x128xf32> to vector<2x32xf32>
    %27 = vector.extract_strided_slice %24 {offsets = [0, 64], sizes = [2, 32], strides = [1, 1]} : vector<2x128xf32> to vector<2x32xf32>
    %28 = vector.extract_strided_slice %23 {offsets = [0, 96], sizes = [2, 32], strides = [1, 1]} : vector<2x128xf32> to vector<2x32xf32>
    %29 = arith.mulf %26, %9 : vector<2x32xf32>
    %30 = arith.mulf %25, %27 : vector<2x32xf32>
    %31 = arith.addf %29, %30 : vector<2x32xf32>
    %32 = math.tanh %31 : vector<2x32xf32>
    %33 = arith.mulf %28, %32 : vector<2x32xf32>
    %cst_23 = arith.constant dense<0.000000e+00> : vector<2x128xf32>
    %34 = tpu.matmul %33, %1, %cst_23 {dimension_numbers = #tpu.dot_dimension_numbers<[1], [0], [0], [1], [0, 0, 1, 1], [], []>} : vector<2x32xf32>, vector<32x128xf32>, vector<2x128xf32> -> vector<2x128xf32>
    %35 = arith.addf %34, %14 : vector<2x128xf32>
    %36 = arith.addf %35, %5 : vector<2x128xf32>
    %37 = arith.negf %36 : vector<2x128xf32>
    %38 = math.exp %37 : vector<2x128xf32>
    %cst_24 = arith.constant 1.000000e+00 : f32
    %39 = vector.broadcast %cst_24 : f32 to vector<2x128xf32>
    %40 = arith.addf %39, %38 : vector<2x128xf32>
    %41 = arith.divf %39, %40 : vector<2x128xf32>
    %42 = math.tanh %36 : vector<2x128xf32>
    %43 = vector.extract_strided_slice %41 {offsets = [0, 0], sizes = [2, 32], strides = [1, 1]} : vector<2x128xf32> to vector<2x32xf32>
    %44 = vector.extract_strided_slice %41 {offsets = [0, 32], sizes = [2, 32], strides = [1, 1]} : vector<2x128xf32> to vector<2x32xf32>
    %45 = vector.extract_strided_slice %42 {offsets = [0, 64], sizes = [2, 32], strides = [1, 1]} : vector<2x128xf32> to vector<2x32xf32>
    %46 = vector.extract_strided_slice %41 {offsets = [0, 96], sizes = [2, 32], strides = [1, 1]} : vector<2x128xf32> to vector<2x32xf32>
    %47 = arith.mulf %44, %13 : vector<2x32xf32>
    %48 = arith.mulf %43, %45 : vector<2x32xf32>
    %49 = arith.addf %47, %48 : vector<2x32xf32>
    %50 = math.tanh %49 : vector<2x32xf32>
    %51 = arith.mulf %46, %50 : vector<2x32xf32>
    %cst_25 = arith.constant dense<0.000000e+00> : vector<2x128xf32>
    %52 = tpu.matmul %51, %2, %cst_25 {dimension_numbers = #tpu.dot_dimension_numbers<[1], [0], [0], [1], [0, 0, 1, 1], [], []>} : vector<2x32xf32>, vector<32x128xf32>, vector<2x128xf32> -> vector<2x128xf32>
    %c1_26 = arith.constant 1 : index
    %c0_27 = arith.constant 0 : index
    %c0_28 = arith.constant 0 : index
    %53 = vector.load %arg0[%c1_26, %c0_27, %c0_28] : memref<8x2x128xf32, #tpu.memory_space<vmem>>, vector<1x2x128xf32>
    %54 = vector.shape_cast %53 : vector<1x2x128xf32> to vector<2x128xf32>
    %cst_29 = arith.constant dense<0.000000e+00> : vector<2x128xf32>
    %55 = tpu.matmul %33, %0, %cst_29 {dimension_numbers = #tpu.dot_dimension_numbers<[1], [0], [0], [1], [0, 0, 1, 1], [], []>} : vector<2x32xf32>, vector<32x128xf32>, vector<2x128xf32> -> vector<2x128xf32>
    %56 = arith.addf %54, %55 : vector<2x128xf32>
    %57 = arith.negf %56 : vector<2x128xf32>
    %58 = math.exp %57 : vector<2x128xf32>
    %cst_30 = arith.constant 1.000000e+00 : f32
    %59 = vector.broadcast %cst_30 : f32 to vector<2x128xf32>
    %60 = arith.addf %59, %58 : vector<2x128xf32>
    %61 = arith.divf %59, %60 : vector<2x128xf32>
    %62 = math.tanh %56 : vector<2x128xf32>
    %63 = vector.extract_strided_slice %61 {offsets = [0, 0], sizes = [2, 32], strides = [1, 1]} : vector<2x128xf32> to vector<2x32xf32>
    %64 = vector.extract_strided_slice %61 {offsets = [0, 32], sizes = [2, 32], strides = [1, 1]} : vector<2x128xf32> to vector<2x32xf32>
    %65 = vector.extract_strided_slice %62 {offsets = [0, 64], sizes = [2, 32], strides = [1, 1]} : vector<2x128xf32> to vector<2x32xf32>
    %66 = vector.extract_strided_slice %61 {offsets = [0, 96], sizes = [2, 32], strides = [1, 1]} : vector<2x128xf32> to vector<2x32xf32>
    %67 = arith.mulf %64, %31 : vector<2x32xf32>
    %68 = arith.mulf %63, %65 : vector<2x32xf32>
    %69 = arith.addf %67, %68 : vector<2x32xf32>
    %70 = math.tanh %69 : vector<2x32xf32>
    %71 = arith.mulf %66, %70 : vector<2x32xf32>
    %cst_31 = arith.constant dense<0.000000e+00> : vector<2x128xf32>
    %72 = tpu.matmul %71, %1, %cst_31 {dimension_numbers = #tpu.dot_dimension_numbers<[1], [0], [0], [1], [0, 0, 1, 1], [], []>} : vector<2x32xf32>, vector<32x128xf32>, vector<2x128xf32> -> vector<2x128xf32>
    %73 = arith.addf %72, %52 : vector<2x128xf32>
    %74 = arith.addf %73, %5 : vector<2x128xf32>
    %75 = arith.negf %74 : vector<2x128xf32>
    %76 = math.exp %75 : vector<2x128xf32>
    %cst_32 = arith.constant 1.000000e+00 : f32
    %77 = vector.broadcast %cst_32 : f32 to vector<2x128xf32>
    %78 = arith.addf %77, %76 : vector<2x128xf32>
    %79 = arith.divf %77, %78 : vector<2x128xf32>
    %80 = math.tanh %74 : vector<2x128xf32>
    %81 = vector.extract_strided_slice %79 {offsets = [0, 0], sizes = [2, 32], strides = [1, 1]} : vector<2x128xf32> to vector<2x32xf32>
    %82 = vector.extract_strided_slice %79 {offsets = [0, 32], sizes = [2, 32], strides = [1, 1]} : vector<2x128xf32> to vector<2x32xf32>
    %83 = vector.extract_strided_slice %80 {offsets = [0, 64], sizes = [2, 32], strides = [1, 1]} : vector<2x128xf32> to vector<2x32xf32>
    %84 = vector.extract_strided_slice %79 {offsets = [0, 96], sizes = [2, 32], strides = [1, 1]} : vector<2x128xf32> to vector<2x32xf32>
    %85 = arith.mulf %82, %49 : vector<2x32xf32>
    %86 = arith.mulf %81, %83 : vector<2x32xf32>
    %87 = arith.addf %85, %86 : vector<2x32xf32>
    %88 = math.tanh %87 : vector<2x32xf32>
    %89 = arith.mulf %84, %88 : vector<2x32xf32>
    %cst_33 = arith.constant dense<0.000000e+00> : vector<2x128xf32>
    %90 = tpu.matmul %89, %2, %cst_33 {dimension_numbers = #tpu.dot_dimension_numbers<[1], [0], [0], [1], [0, 0, 1, 1], [], []>} : vector<2x32xf32>, vector<32x128xf32>, vector<2x128xf32> -> vector<2x128xf32>
    %c2 = arith.constant 2 : index
    %c0_34 = arith.constant 0 : index
    %c0_35 = arith.constant 0 : index
    %91 = vector.load %arg0[%c2, %c0_34, %c0_35] : memref<8x2x128xf32, #tpu.memory_space<vmem>>, vector<1x2x128xf32>
    %92 = vector.shape_cast %91 : vector<1x2x128xf32> to vector<2x128xf32>
    %cst_36 = arith.constant dense<0.000000e+00> : vector<2x128xf32>
    %93 = tpu.matmul %71, %0, %cst_36 {dimension_numbers = #tpu.dot_dimension_numbers<[1], [0], [0], [1], [0, 0, 1, 1], [], []>} : vector<2x32xf32>, vector<32x128xf32>, vector<2x128xf32> -> vector<2x128xf32>
    %94 = arith.addf %92, %93 : vector<2x128xf32>
    %95 = arith.negf %94 : vector<2x128xf32>
    %96 = math.exp %95 : vector<2x128xf32>
    %cst_37 = arith.constant 1.000000e+00 : f32
    %97 = vector.broadcast %cst_37 : f32 to vector<2x128xf32>
    %98 = arith.addf %97, %96 : vector<2x128xf32>
    %99 = arith.divf %97, %98 : vector<2x128xf32>
    %100 = math.tanh %94 : vector<2x128xf32>
    %101 = vector.extract_strided_slice %99 {offsets = [0, 0], sizes = [2, 32], strides = [1, 1]} : vector<2x128xf32> to vector<2x32xf32>
    %102 = vector.extract_strided_slice %99 {offsets = [0, 32], sizes = [2, 32], strides = [1, 1]} : vector<2x128xf32> to vector<2x32xf32>
    %103 = vector.extract_strided_slice %100 {offsets = [0, 64], sizes = [2, 32], strides = [1, 1]} : vector<2x128xf32> to vector<2x32xf32>
    %104 = vector.extract_strided_slice %99 {offsets = [0, 96], sizes = [2, 32], strides = [1, 1]} : vector<2x128xf32> to vector<2x32xf32>
    %105 = arith.mulf %102, %69 : vector<2x32xf32>
    %106 = arith.mulf %101, %103 : vector<2x32xf32>
    %107 = arith.addf %105, %106 : vector<2x32xf32>
    %108 = math.tanh %107 : vector<2x32xf32>
    %109 = arith.mulf %104, %108 : vector<2x32xf32>
    %cst_38 = arith.constant dense<0.000000e+00> : vector<2x128xf32>
    %110 = tpu.matmul %109, %1, %cst_38 {dimension_numbers = #tpu.dot_dimension_numbers<[1], [0], [0], [1], [0, 0, 1, 1], [], []>} : vector<2x32xf32>, vector<32x128xf32>, vector<2x128xf32> -> vector<2x128xf32>
    %111 = arith.addf %110, %90 : vector<2x128xf32>
    %112 = arith.addf %111, %5 : vector<2x128xf32>
    %113 = arith.negf %112 : vector<2x128xf32>
    %114 = math.exp %113 : vector<2x128xf32>
    %cst_39 = arith.constant 1.000000e+00 : f32
    %115 = vector.broadcast %cst_39 : f32 to vector<2x128xf32>
    %116 = arith.addf %115, %114 : vector<2x128xf32>
    %117 = arith.divf %115, %116 : vector<2x128xf32>
    %118 = math.tanh %112 : vector<2x128xf32>
    %119 = vector.extract_strided_slice %117 {offsets = [0, 0], sizes = [2, 32], strides = [1, 1]} : vector<2x128xf32> to vector<2x32xf32>
    %120 = vector.extract_strided_slice %117 {offsets = [0, 32], sizes = [2, 32], strides = [1, 1]} : vector<2x128xf32> to vector<2x32xf32>
    %121 = vector.extract_strided_slice %118 {offsets = [0, 64], sizes = [2, 32], strides = [1, 1]} : vector<2x128xf32> to vector<2x32xf32>
    %122 = vector.extract_strided_slice %117 {offsets = [0, 96], sizes = [2, 32], strides = [1, 1]} : vector<2x128xf32> to vector<2x32xf32>
    %123 = arith.mulf %120, %87 : vector<2x32xf32>
    %124 = arith.mulf %119, %121 : vector<2x32xf32>
    %125 = arith.addf %123, %124 : vector<2x32xf32>
    %126 = math.tanh %125 : vector<2x32xf32>
    %127 = arith.mulf %122, %126 : vector<2x32xf32>
    %cst_40 = arith.constant dense<0.000000e+00> : vector<2x128xf32>
    %128 = tpu.matmul %127, %2, %cst_40 {dimension_numbers = #tpu.dot_dimension_numbers<[1], [0], [0], [1], [0, 0, 1, 1], [], []>} : vector<2x32xf32>, vector<32x128xf32>, vector<2x128xf32> -> vector<2x128xf32>
    %c3 = arith.constant 3 : index
    %c0_41 = arith.constant 0 : index
    %c0_42 = arith.constant 0 : index
    %129 = vector.load %arg0[%c3, %c0_41, %c0_42] : memref<8x2x128xf32, #tpu.memory_space<vmem>>, vector<1x2x128xf32>
    %130 = vector.shape_cast %129 : vector<1x2x128xf32> to vector<2x128xf32>
    %cst_43 = arith.constant dense<0.000000e+00> : vector<2x128xf32>
    %131 = tpu.matmul %109, %0, %cst_43 {dimension_numbers = #tpu.dot_dimension_numbers<[1], [0], [0], [1], [0, 0, 1, 1], [], []>} : vector<2x32xf32>, vector<32x128xf32>, vector<2x128xf32> -> vector<2x128xf32>
    %132 = arith.addf %130, %131 : vector<2x128xf32>
    %133 = arith.negf %132 : vector<2x128xf32>
    %134 = math.exp %133 : vector<2x128xf32>
    %cst_44 = arith.constant 1.000000e+00 : f32
    %135 = vector.broadcast %cst_44 : f32 to vector<2x128xf32>
    %136 = arith.addf %135, %134 : vector<2x128xf32>
    %137 = arith.divf %135, %136 : vector<2x128xf32>
    %138 = math.tanh %132 : vector<2x128xf32>
    %139 = vector.extract_strided_slice %137 {offsets = [0, 0], sizes = [2, 32], strides = [1, 1]} : vector<2x128xf32> to vector<2x32xf32>
    %140 = vector.extract_strided_slice %137 {offsets = [0, 32], sizes = [2, 32], strides = [1, 1]} : vector<2x128xf32> to vector<2x32xf32>
    %141 = vector.extract_strided_slice %138 {offsets = [0, 64], sizes = [2, 32], strides = [1, 1]} : vector<2x128xf32> to vector<2x32xf32>
    %142 = vector.extract_strided_slice %137 {offsets = [0, 96], sizes = [2, 32], strides = [1, 1]} : vector<2x128xf32> to vector<2x32xf32>
    %143 = arith.mulf %140, %107 : vector<2x32xf32>
    %144 = arith.mulf %139, %141 : vector<2x32xf32>
    %145 = arith.addf %143, %144 : vector<2x32xf32>
    %146 = math.tanh %145 : vector<2x32xf32>
    %147 = arith.mulf %142, %146 : vector<2x32xf32>
    %cst_45 = arith.constant dense<0.000000e+00> : vector<2x128xf32>
    %148 = tpu.matmul %147, %1, %cst_45 {dimension_numbers = #tpu.dot_dimension_numbers<[1], [0], [0], [1], [0, 0, 1, 1], [], []>} : vector<2x32xf32>, vector<32x128xf32>, vector<2x128xf32> -> vector<2x128xf32>
    %149 = arith.addf %148, %128 : vector<2x128xf32>
    %150 = arith.addf %149, %5 : vector<2x128xf32>
    %151 = arith.negf %150 : vector<2x128xf32>
    %152 = math.exp %151 : vector<2x128xf32>
    %cst_46 = arith.constant 1.000000e+00 : f32
    %153 = vector.broadcast %cst_46 : f32 to vector<2x128xf32>
    %154 = arith.addf %153, %152 : vector<2x128xf32>
    %155 = arith.divf %153, %154 : vector<2x128xf32>
    %156 = math.tanh %150 : vector<2x128xf32>
    %157 = vector.extract_strided_slice %155 {offsets = [0, 0], sizes = [2, 32], strides = [1, 1]} : vector<2x128xf32> to vector<2x32xf32>
    %158 = vector.extract_strided_slice %155 {offsets = [0, 32], sizes = [2, 32], strides = [1, 1]} : vector<2x128xf32> to vector<2x32xf32>
    %159 = vector.extract_strided_slice %156 {offsets = [0, 64], sizes = [2, 32], strides = [1, 1]} : vector<2x128xf32> to vector<2x32xf32>
    %160 = vector.extract_strided_slice %155 {offsets = [0, 96], sizes = [2, 32], strides = [1, 1]} : vector<2x128xf32> to vector<2x32xf32>
    %161 = arith.mulf %158, %125 : vector<2x32xf32>
    %162 = arith.mulf %157, %159 : vector<2x32xf32>
    %163 = arith.addf %161, %162 : vector<2x32xf32>
    %164 = math.tanh %163 : vector<2x32xf32>
    %165 = arith.mulf %160, %164 : vector<2x32xf32>
    %cst_47 = arith.constant dense<0.000000e+00> : vector<2x128xf32>
    %166 = tpu.matmul %165, %2, %cst_47 {dimension_numbers = #tpu.dot_dimension_numbers<[1], [0], [0], [1], [0, 0, 1, 1], [], []>} : vector<2x32xf32>, vector<32x128xf32>, vector<2x128xf32> -> vector<2x128xf32>
    %c4 = arith.constant 4 : index
    %c0_48 = arith.constant 0 : index
    %c0_49 = arith.constant 0 : index
    %167 = vector.load %arg0[%c4, %c0_48, %c0_49] : memref<8x2x128xf32, #tpu.memory_space<vmem>>, vector<1x2x128xf32>
    %168 = vector.shape_cast %167 : vector<1x2x128xf32> to vector<2x128xf32>
    %cst_50 = arith.constant dense<0.000000e+00> : vector<2x128xf32>
    %169 = tpu.matmul %147, %0, %cst_50 {dimension_numbers = #tpu.dot_dimension_numbers<[1], [0], [0], [1], [0, 0, 1, 1], [], []>} : vector<2x32xf32>, vector<32x128xf32>, vector<2x128xf32> -> vector<2x128xf32>
    %170 = arith.addf %168, %169 : vector<2x128xf32>
    %171 = arith.negf %170 : vector<2x128xf32>
    %172 = math.exp %171 : vector<2x128xf32>
    %cst_51 = arith.constant 1.000000e+00 : f32
    %173 = vector.broadcast %cst_51 : f32 to vector<2x128xf32>
    %174 = arith.addf %173, %172 : vector<2x128xf32>
    %175 = arith.divf %173, %174 : vector<2x128xf32>
    %176 = math.tanh %170 : vector<2x128xf32>
    %177 = vector.extract_strided_slice %175 {offsets = [0, 0], sizes = [2, 32], strides = [1, 1]} : vector<2x128xf32> to vector<2x32xf32>
    %178 = vector.extract_strided_slice %175 {offsets = [0, 32], sizes = [2, 32], strides = [1, 1]} : vector<2x128xf32> to vector<2x32xf32>
    %179 = vector.extract_strided_slice %176 {offsets = [0, 64], sizes = [2, 32], strides = [1, 1]} : vector<2x128xf32> to vector<2x32xf32>
    %180 = vector.extract_strided_slice %175 {offsets = [0, 96], sizes = [2, 32], strides = [1, 1]} : vector<2x128xf32> to vector<2x32xf32>
    %181 = arith.mulf %178, %145 : vector<2x32xf32>
    %182 = arith.mulf %177, %179 : vector<2x32xf32>
    %183 = arith.addf %181, %182 : vector<2x32xf32>
    %184 = math.tanh %183 : vector<2x32xf32>
    %185 = arith.mulf %180, %184 : vector<2x32xf32>
    %cst_52 = arith.constant dense<0.000000e+00> : vector<2x128xf32>
    %186 = tpu.matmul %185, %1, %cst_52 {dimension_numbers = #tpu.dot_dimension_numbers<[1], [0], [0], [1], [0, 0, 1, 1], [], []>} : vector<2x32xf32>, vector<32x128xf32>, vector<2x128xf32> -> vector<2x128xf32>
    %187 = arith.addf %186, %166 : vector<2x128xf32>
    %188 = arith.addf %187, %5 : vector<2x128xf32>
    %189 = arith.negf %188 : vector<2x128xf32>
    %190 = math.exp %189 : vector<2x128xf32>
    %cst_53 = arith.constant 1.000000e+00 : f32
    %191 = vector.broadcast %cst_53 : f32 to vector<2x128xf32>
    %192 = arith.addf %191, %190 : vector<2x128xf32>
    %193 = arith.divf %191, %192 : vector<2x128xf32>
    %194 = math.tanh %188 : vector<2x128xf32>
    %195 = vector.extract_strided_slice %193 {offsets = [0, 0], sizes = [2, 32], strides = [1, 1]} : vector<2x128xf32> to vector<2x32xf32>
    %196 = vector.extract_strided_slice %193 {offsets = [0, 32], sizes = [2, 32], strides = [1, 1]} : vector<2x128xf32> to vector<2x32xf32>
    %197 = vector.extract_strided_slice %194 {offsets = [0, 64], sizes = [2, 32], strides = [1, 1]} : vector<2x128xf32> to vector<2x32xf32>
    %198 = vector.extract_strided_slice %193 {offsets = [0, 96], sizes = [2, 32], strides = [1, 1]} : vector<2x128xf32> to vector<2x32xf32>
    %199 = arith.mulf %196, %163 : vector<2x32xf32>
    %200 = arith.mulf %195, %197 : vector<2x32xf32>
    %201 = arith.addf %199, %200 : vector<2x32xf32>
    %202 = math.tanh %201 : vector<2x32xf32>
    %203 = arith.mulf %198, %202 : vector<2x32xf32>
    %cst_54 = arith.constant dense<0.000000e+00> : vector<2x128xf32>
    %204 = tpu.matmul %203, %2, %cst_54 {dimension_numbers = #tpu.dot_dimension_numbers<[1], [0], [0], [1], [0, 0, 1, 1], [], []>} : vector<2x32xf32>, vector<32x128xf32>, vector<2x128xf32> -> vector<2x128xf32>
    %c5 = arith.constant 5 : index
    %c0_55 = arith.constant 0 : index
    %c0_56 = arith.constant 0 : index
    %205 = vector.load %arg0[%c5, %c0_55, %c0_56] : memref<8x2x128xf32, #tpu.memory_space<vmem>>, vector<1x2x128xf32>
    %206 = vector.shape_cast %205 : vector<1x2x128xf32> to vector<2x128xf32>
    %cst_57 = arith.constant dense<0.000000e+00> : vector<2x128xf32>
    %207 = tpu.matmul %185, %0, %cst_57 {dimension_numbers = #tpu.dot_dimension_numbers<[1], [0], [0], [1], [0, 0, 1, 1], [], []>} : vector<2x32xf32>, vector<32x128xf32>, vector<2x128xf32> -> vector<2x128xf32>
    %208 = arith.addf %206, %207 : vector<2x128xf32>
    %209 = arith.negf %208 : vector<2x128xf32>
    %210 = math.exp %209 : vector<2x128xf32>
    %cst_58 = arith.constant 1.000000e+00 : f32
    %211 = vector.broadcast %cst_58 : f32 to vector<2x128xf32>
    %212 = arith.addf %211, %210 : vector<2x128xf32>
    %213 = arith.divf %211, %212 : vector<2x128xf32>
    %214 = math.tanh %208 : vector<2x128xf32>
    %215 = vector.extract_strided_slice %213 {offsets = [0, 0], sizes = [2, 32], strides = [1, 1]} : vector<2x128xf32> to vector<2x32xf32>
    %216 = vector.extract_strided_slice %213 {offsets = [0, 32], sizes = [2, 32], strides = [1, 1]} : vector<2x128xf32> to vector<2x32xf32>
    %217 = vector.extract_strided_slice %214 {offsets = [0, 64], sizes = [2, 32], strides = [1, 1]} : vector<2x128xf32> to vector<2x32xf32>
    %218 = vector.extract_strided_slice %213 {offsets = [0, 96], sizes = [2, 32], strides = [1, 1]} : vector<2x128xf32> to vector<2x32xf32>
    %219 = arith.mulf %216, %183 : vector<2x32xf32>
    %220 = arith.mulf %215, %217 : vector<2x32xf32>
    %221 = arith.addf %219, %220 : vector<2x32xf32>
    %222 = math.tanh %221 : vector<2x32xf32>
    %223 = arith.mulf %218, %222 : vector<2x32xf32>
    %cst_59 = arith.constant dense<0.000000e+00> : vector<2x128xf32>
    %224 = tpu.matmul %223, %1, %cst_59 {dimension_numbers = #tpu.dot_dimension_numbers<[1], [0], [0], [1], [0, 0, 1, 1], [], []>} : vector<2x32xf32>, vector<32x128xf32>, vector<2x128xf32> -> vector<2x128xf32>
    %225 = arith.addf %224, %204 : vector<2x128xf32>
    %226 = arith.addf %225, %5 : vector<2x128xf32>
    %227 = arith.negf %226 : vector<2x128xf32>
    %228 = math.exp %227 : vector<2x128xf32>
    %cst_60 = arith.constant 1.000000e+00 : f32
    %229 = vector.broadcast %cst_60 : f32 to vector<2x128xf32>
    %230 = arith.addf %229, %228 : vector<2x128xf32>
    %231 = arith.divf %229, %230 : vector<2x128xf32>
    %232 = math.tanh %226 : vector<2x128xf32>
    %233 = vector.extract_strided_slice %231 {offsets = [0, 0], sizes = [2, 32], strides = [1, 1]} : vector<2x128xf32> to vector<2x32xf32>
    %234 = vector.extract_strided_slice %231 {offsets = [0, 32], sizes = [2, 32], strides = [1, 1]} : vector<2x128xf32> to vector<2x32xf32>
    %235 = vector.extract_strided_slice %232 {offsets = [0, 64], sizes = [2, 32], strides = [1, 1]} : vector<2x128xf32> to vector<2x32xf32>
    %236 = vector.extract_strided_slice %231 {offsets = [0, 96], sizes = [2, 32], strides = [1, 1]} : vector<2x128xf32> to vector<2x32xf32>
    %237 = arith.mulf %234, %201 : vector<2x32xf32>
    %238 = arith.mulf %233, %235 : vector<2x32xf32>
    %239 = arith.addf %237, %238 : vector<2x32xf32>
    %240 = math.tanh %239 : vector<2x32xf32>
    %241 = arith.mulf %236, %240 : vector<2x32xf32>
    %cst_61 = arith.constant dense<0.000000e+00> : vector<2x128xf32>
    %242 = tpu.matmul %241, %2, %cst_61 {dimension_numbers = #tpu.dot_dimension_numbers<[1], [0], [0], [1], [0, 0, 1, 1], [], []>} : vector<2x32xf32>, vector<32x128xf32>, vector<2x128xf32> -> vector<2x128xf32>
    %c6 = arith.constant 6 : index
    %c0_62 = arith.constant 0 : index
    %c0_63 = arith.constant 0 : index
    %243 = vector.load %arg0[%c6, %c0_62, %c0_63] : memref<8x2x128xf32, #tpu.memory_space<vmem>>, vector<1x2x128xf32>
    %244 = vector.shape_cast %243 : vector<1x2x128xf32> to vector<2x128xf32>
    %cst_64 = arith.constant dense<0.000000e+00> : vector<2x128xf32>
    %245 = tpu.matmul %223, %0, %cst_64 {dimension_numbers = #tpu.dot_dimension_numbers<[1], [0], [0], [1], [0, 0, 1, 1], [], []>} : vector<2x32xf32>, vector<32x128xf32>, vector<2x128xf32> -> vector<2x128xf32>
    %246 = arith.addf %244, %245 : vector<2x128xf32>
    %247 = arith.negf %246 : vector<2x128xf32>
    %248 = math.exp %247 : vector<2x128xf32>
    %cst_65 = arith.constant 1.000000e+00 : f32
    %249 = vector.broadcast %cst_65 : f32 to vector<2x128xf32>
    %250 = arith.addf %249, %248 : vector<2x128xf32>
    %251 = arith.divf %249, %250 : vector<2x128xf32>
    %252 = math.tanh %246 : vector<2x128xf32>
    %253 = vector.extract_strided_slice %251 {offsets = [0, 0], sizes = [2, 32], strides = [1, 1]} : vector<2x128xf32> to vector<2x32xf32>
    %254 = vector.extract_strided_slice %251 {offsets = [0, 32], sizes = [2, 32], strides = [1, 1]} : vector<2x128xf32> to vector<2x32xf32>
    %255 = vector.extract_strided_slice %252 {offsets = [0, 64], sizes = [2, 32], strides = [1, 1]} : vector<2x128xf32> to vector<2x32xf32>
    %256 = vector.extract_strided_slice %251 {offsets = [0, 96], sizes = [2, 32], strides = [1, 1]} : vector<2x128xf32> to vector<2x32xf32>
    %257 = arith.mulf %254, %221 : vector<2x32xf32>
    %258 = arith.mulf %253, %255 : vector<2x32xf32>
    %259 = arith.addf %257, %258 : vector<2x32xf32>
    %260 = math.tanh %259 : vector<2x32xf32>
    %261 = arith.mulf %256, %260 : vector<2x32xf32>
    %cst_66 = arith.constant dense<0.000000e+00> : vector<2x128xf32>
    %262 = tpu.matmul %261, %1, %cst_66 {dimension_numbers = #tpu.dot_dimension_numbers<[1], [0], [0], [1], [0, 0, 1, 1], [], []>} : vector<2x32xf32>, vector<32x128xf32>, vector<2x128xf32> -> vector<2x128xf32>
    %263 = arith.addf %262, %242 : vector<2x128xf32>
    %264 = arith.addf %263, %5 : vector<2x128xf32>
    %265 = arith.negf %264 : vector<2x128xf32>
    %266 = math.exp %265 : vector<2x128xf32>
    %cst_67 = arith.constant 1.000000e+00 : f32
    %267 = vector.broadcast %cst_67 : f32 to vector<2x128xf32>
    %268 = arith.addf %267, %266 : vector<2x128xf32>
    %269 = arith.divf %267, %268 : vector<2x128xf32>
    %270 = math.tanh %264 : vector<2x128xf32>
    %271 = vector.extract_strided_slice %269 {offsets = [0, 0], sizes = [2, 32], strides = [1, 1]} : vector<2x128xf32> to vector<2x32xf32>
    %272 = vector.extract_strided_slice %269 {offsets = [0, 32], sizes = [2, 32], strides = [1, 1]} : vector<2x128xf32> to vector<2x32xf32>
    %273 = vector.extract_strided_slice %270 {offsets = [0, 64], sizes = [2, 32], strides = [1, 1]} : vector<2x128xf32> to vector<2x32xf32>
    %274 = vector.extract_strided_slice %269 {offsets = [0, 96], sizes = [2, 32], strides = [1, 1]} : vector<2x128xf32> to vector<2x32xf32>
    %275 = arith.mulf %272, %239 : vector<2x32xf32>
    %276 = arith.mulf %271, %273 : vector<2x32xf32>
    %277 = arith.addf %275, %276 : vector<2x32xf32>
    %278 = math.tanh %277 : vector<2x32xf32>
    %279 = arith.mulf %274, %278 : vector<2x32xf32>
    %cst_68 = arith.constant dense<0.000000e+00> : vector<2x128xf32>
    %280 = tpu.matmul %279, %2, %cst_68 {dimension_numbers = #tpu.dot_dimension_numbers<[1], [0], [0], [1], [0, 0, 1, 1], [], []>} : vector<2x32xf32>, vector<32x128xf32>, vector<2x128xf32> -> vector<2x128xf32>
    %c7 = arith.constant 7 : index
    %c0_69 = arith.constant 0 : index
    %c0_70 = arith.constant 0 : index
    %281 = vector.load %arg0[%c7, %c0_69, %c0_70] : memref<8x2x128xf32, #tpu.memory_space<vmem>>, vector<1x2x128xf32>
    %282 = vector.shape_cast %281 : vector<1x2x128xf32> to vector<2x128xf32>
    %cst_71 = arith.constant dense<0.000000e+00> : vector<2x128xf32>
    %283 = tpu.matmul %261, %0, %cst_71 {dimension_numbers = #tpu.dot_dimension_numbers<[1], [0], [0], [1], [0, 0, 1, 1], [], []>} : vector<2x32xf32>, vector<32x128xf32>, vector<2x128xf32> -> vector<2x128xf32>
    %284 = arith.addf %282, %283 : vector<2x128xf32>
    %285 = arith.negf %284 : vector<2x128xf32>
    %286 = math.exp %285 : vector<2x128xf32>
    %cst_72 = arith.constant 1.000000e+00 : f32
    %287 = vector.broadcast %cst_72 : f32 to vector<2x128xf32>
    %288 = arith.addf %287, %286 : vector<2x128xf32>
    %289 = arith.divf %287, %288 : vector<2x128xf32>
    %290 = math.tanh %284 : vector<2x128xf32>
    %291 = vector.extract_strided_slice %289 {offsets = [0, 0], sizes = [2, 32], strides = [1, 1]} : vector<2x128xf32> to vector<2x32xf32>
    %292 = vector.extract_strided_slice %289 {offsets = [0, 32], sizes = [2, 32], strides = [1, 1]} : vector<2x128xf32> to vector<2x32xf32>
    %293 = vector.extract_strided_slice %290 {offsets = [0, 64], sizes = [2, 32], strides = [1, 1]} : vector<2x128xf32> to vector<2x32xf32>
    %294 = vector.extract_strided_slice %289 {offsets = [0, 96], sizes = [2, 32], strides = [1, 1]} : vector<2x128xf32> to vector<2x32xf32>
    %295 = arith.mulf %292, %259 : vector<2x32xf32>
    %296 = arith.mulf %291, %293 : vector<2x32xf32>
    %297 = arith.addf %295, %296 : vector<2x32xf32>
    %298 = math.tanh %297 : vector<2x32xf32>
    %299 = arith.mulf %294, %298 : vector<2x32xf32>
    %cst_73 = arith.constant dense<0.000000e+00> : vector<2x128xf32>
    %300 = tpu.matmul %299, %1, %cst_73 {dimension_numbers = #tpu.dot_dimension_numbers<[1], [0], [0], [1], [0, 0, 1, 1], [], []>} : vector<2x32xf32>, vector<32x128xf32>, vector<2x128xf32> -> vector<2x128xf32>
    %301 = arith.addf %300, %280 : vector<2x128xf32>
    %302 = arith.addf %301, %5 : vector<2x128xf32>
    %303 = arith.negf %302 : vector<2x128xf32>
    %304 = math.exp %303 : vector<2x128xf32>
    %cst_74 = arith.constant 1.000000e+00 : f32
    %305 = vector.broadcast %cst_74 : f32 to vector<2x128xf32>
    %306 = arith.addf %305, %304 : vector<2x128xf32>
    %307 = arith.divf %305, %306 : vector<2x128xf32>
    %308 = math.tanh %302 : vector<2x128xf32>
    %309 = vector.extract_strided_slice %307 {offsets = [0, 0], sizes = [2, 32], strides = [1, 1]} : vector<2x128xf32> to vector<2x32xf32>
    %310 = vector.extract_strided_slice %307 {offsets = [0, 32], sizes = [2, 32], strides = [1, 1]} : vector<2x128xf32> to vector<2x32xf32>
    %311 = vector.extract_strided_slice %308 {offsets = [0, 64], sizes = [2, 32], strides = [1, 1]} : vector<2x128xf32> to vector<2x32xf32>
    %312 = vector.extract_strided_slice %307 {offsets = [0, 96], sizes = [2, 32], strides = [1, 1]} : vector<2x128xf32> to vector<2x32xf32>
    %313 = arith.mulf %310, %277 : vector<2x32xf32>
    %314 = arith.mulf %309, %311 : vector<2x32xf32>
    %315 = arith.addf %313, %314 : vector<2x32xf32>
    %316 = math.tanh %315 : vector<2x32xf32>
    %317 = arith.mulf %312, %316 : vector<2x32xf32>
    %318 = tpu.concatenate %51, %89, %127, %165, %203, %241, %279, %317 in 0 : vector<2x32xf32>, vector<2x32xf32>, vector<2x32xf32>, vector<2x32xf32>, vector<2x32xf32>, vector<2x32xf32>, vector<2x32xf32>, vector<2x32xf32> -> vector<16x32xf32>
    %c0_75 = arith.constant 0 : index
    %c0_76 = arith.constant 0 : index
    %319 = vector.load %arg5[%c0_75, %c0_76] : memref<32x128xf32, #tpu.memory_space<vmem>>, vector<32x128xf32>
    %cst_77 = arith.constant dense<0.000000e+00> : vector<16x128xf32>
    %320 = tpu.matmul %318, %319, %cst_77 {dimension_numbers = #tpu.dot_dimension_numbers<[1], [0], [0], [1], [0, 0, 1, 1], [], []>} : vector<16x32xf32>, vector<32x128xf32>, vector<16x128xf32> -> vector<16x128xf32>
    %c0_78 = arith.constant 0 : index
    %c0_79 = arith.constant 0 : index
    %321 = vector.load %arg6[%c0_78, %c0_79] : memref<1x128xf32, #tpu.memory_space<vmem>>, vector<1x128xf32>
    %322 = vector.broadcast %321 : vector<1x128xf32> to vector<16x128xf32>
    %323 = arith.addf %320, %322 : vector<16x128xf32>
    %c0_80 = arith.constant 0 : index
    %c0_81 = arith.constant 0 : index
    %324 = vector.load %arg9[%c0_80, %c0_81] : memref<16x128xf32, #tpu.memory_space<vmem>>, vector<16x128xf32>
    tpu.vector_store %arg9[%c0_80, %c0_81], %323 {strides = array<i32>} : memref<16x128xf32, #tpu.memory_space<vmem>>, vector<16x128xf32>,
    %c0_82 = arith.constant 0 : index
    %c0_83 = arith.constant 0 : index
    %c0_84 = arith.constant 0 : index
    %325 = vector.load %arg10[%c0_82, %c0_83, %c0_84] : memref<2x2x32xf32, #tpu.memory_space<vmem>>, vector<1x2x32xf32>
    %326 = vector.shape_cast %325 : vector<1x2x32xf32> to vector<2x32xf32>
    %327 = vector.shape_cast %299 : vector<2x32xf32> to vector<1x2x32xf32>
    tpu.vector_store %arg10[%c0_82, %c0_83, %c0_84], %327 {strides = array<i32>} : memref<2x2x32xf32, #tpu.memory_space<vmem>>, vector<1x2x32xf32>,
    %c1_85 = arith.constant 1 : index
    %c0_86 = arith.constant 0 : index
    %c0_87 = arith.constant 0 : index
    %328 = vector.load %arg10[%c1_85, %c0_86, %c0_87] : memref<2x2x32xf32, #tpu.memory_space<vmem>>, vector<1x2x32xf32>
    %329 = vector.shape_cast %328 : vector<1x2x32xf32> to vector<2x32xf32>
    %330 = vector.shape_cast %317 : vector<2x32xf32> to vector<1x2x32xf32>
    tpu.vector_store %arg10[%c1_85, %c0_86, %c0_87], %330 {strides = array<i32>} : memref<2x2x32xf32, #tpu.memory_space<vmem>>, vector<1x2x32xf32>,
    %c0_88 = arith.constant 0 : index
    %c0_89 = arith.constant 0 : index
    %c0_90 = arith.constant 0 : index
    %331 = vector.load %arg11[%c0_88, %c0_89, %c0_90] : memref<2x2x32xf32, #tpu.memory_space<vmem>>, vector<1x2x32xf32>
    %332 = vector.shape_cast %331 : vector<1x2x32xf32> to vector<2x32xf32>
    %333 = vector.shape_cast %297 : vector<2x32xf32> to vector<1x2x32xf32>
    tpu.vector_store %arg11[%c0_88, %c0_89, %c0_90], %333 {strides = array<i32>} : memref<2x2x32xf32, #tpu.memory_space<vmem>>, vector<1x2x32xf32>,
    %c1_91 = arith.constant 1 : index
    %c0_92 = arith.constant 0 : index
    %c0_93 = arith.constant 0 : index
    %334 = vector.load %arg11[%c1_91, %c0_92, %c0_93] : memref<2x2x32xf32, #tpu.memory_space<vmem>>, vector<1x2x32xf32>
    %335 = vector.shape_cast %334 : vector<1x2x32xf32> to vector<2x32xf32>
    %336 = vector.shape_cast %315 : vector<2x32xf32> to vector<1x2x32xf32>
    tpu.vector_store %arg11[%c1_91, %c0_92, %c0_93], %336 {strides = array<i32>} : memref<2x2x32xf32, #tpu.memory_space<vmem>>, vector<1x2x32xf32>,
    return
  }
}

</mosaic_0001>

<llo_original>
// kernel: tpu_custom_call.1
$region0: #{tpu_custom_call.1}
  #allocation0 [shape = 'u32[]', space=smem, size = 0x4, offset = 0x4, fixed_abs, tag = 'smem constant byte address 0x4 - core index']
  #allocation1 [shape = 'u32[72,128]{1,0:T(1,128)}', space=vmem, size = 0x9000, scoped, tag = 'internal scratch']
  %s0 = inlined_call_operand.hbm [shape: f32[8,2,128], index: 0, kind: input, shape index: {}]
  %s1 = inlined_call_operand.hbm [shape: f32[32,128], index: 1, kind: input, shape index: {}]
  %s2 = inlined_call_operand.hbm [shape: f32[32,128], index: 2, kind: input, shape index: {}]
  %s3 = inlined_call_operand.hbm [shape: f32[32,128], index: 3, kind: input, shape index: {}]
  %s4 = inlined_call_operand.vmem [shape: f32[1,128], index: 4, kind: input, shape index: {}]
  %s5 = inlined_call_operand.hbm [shape: f32[32,128], index: 5, kind: input, shape index: {}]
  %s6 = inlined_call_operand.vmem [shape: f32[1,128], index: 6, kind: input, shape index: {}]
  %s7 = inlined_call_operand.vmem [shape: f32[2,2,32], index: 7, kind: input, shape index: {}]
  %s8 = inlined_call_operand.hbm [shape: f32[2,2,32], index: 8, kind: input, shape index: {}]
  %s9 = inlined_call_operand.hbm [shape: f32[16,128], index: 9, kind: output, shape index: {0}]
  %s10 = inlined_call_operand.hbm [shape: f32[2,2,32], index: 10, kind: output, shape index: {1}]
  %s11 = inlined_call_operand.hbm [shape: f32[2,2,32], index: 11, kind: output, shape index: {2}]
  %12 = xla_tuple %s9, %s10, %s11
  %s13 = sld [smem:[#allocation0]]
  $region86: #{tpu_custom_call.1} parent=0
    _
  %s15 = ssub.s32 1, %s13
  %s16 = scalar_select 0, %s15, %s13
  $region1: #{tpu_custom_call.1} parent=0
    #allocation2 [shape = 'u8[8192]{0}', space=vmem, size = 0x2000, scoped, tag = 'input window, operand 0, single buffered']
    #allocation3 [shape = 's32[1]{0}', space=sflag, size = 0x4, scoped, tag = 'scoped memory for tpu_custom_call.1']
    #allocation4 [shape = 's32[1]{0}', space=sflag, size = 0x4, scoped, tag = 'scoped memory for tpu_custom_call.1']
    #allocation5 [shape = 'u8[16384]{0}', space=vmem, size = 0x4000, scoped, tag = 'input window, operand 1, single buffered']
    #allocation6 [shape = 's32[1]{0}', space=sflag, size = 0x4, scoped, tag = 'scoped memory for tpu_custom_call.1']
    #allocation7 [shape = 'u8[16384]{0}', space=vmem, size = 0x4000, scoped, tag = 'input window, operand 2, single buffered']
    #allocation8 [shape = 'u8[16384]{0}', space=vmem, size = 0x4000, scoped, tag = 'input window, operand 3, single buffered']
    #allocation9 [shape = 's32[1]{0}', space=sflag, size = 0x4, scoped, tag = 'scoped memory for tpu_custom_call.1']
    #allocation10 [shape = 'u8[16384]{0}', space=vmem, size = 0x4000, scoped, tag = 'input window, operand 5, single buffered']
    #allocation11 [shape = 'u8[2048]{0}', space=vmem, size = 0x800, scoped, tag = 'input window, operand 8, single buffered']
    #allocation12 [shape = 's32[1]{0}', space=sflag, size = 0x4, scoped, tag = 'scoped memory for tpu_custom_call.1']
    #allocation13 [shape = 'u8[8192]{0}', space=vmem, size = 0x2000, scoped, tag = 'output window, operand 0, single buffered']
    #allocation14 [shape = 'u8[2048]{0}', space=vmem, size = 0x800, scoped, tag = 'output window, operand 1, single buffered']
    #allocation15 [shape = 's32[1]{0}', space=sflag, size = 0x4, scoped, tag = 'scoped memory for tpu_custom_call.1']
    #allocation16 [shape = 'u8[2048]{0}', space=vmem, size = 0x800, scoped, tag = 'output window, operand 2, single buffered']
    %17 = vsyncpa [#allocation3], 0
    %18 = vsyncpa [#allocation6], 0
    %19 = vsyncpa [#allocation9], 0
    %20 = vsyncpa [#allocation12], 0
    %21 = vsyncpa [#allocation4], 0
    %22 = vsyncpa [#allocation15], 0
    // Predicated region
    $region2: #{tpu_custom_call.1} parent=1 // pred_check
      _
    $region3: #{tpu_custom_call.1} parent=1 // pred_check_branch
      %24 = sbr.rel (0) target = $region5
    $region4: #{tpu_custom_call.1} parent=1 // pred_region
      %26 = vsyncadd [#allocation3], 0
      %s27 = sshll.u32 %s0, 4
      %s28 = int_to_ptr.hbm [resolvable:$true] %s27
      %s29 = sshll.u32 [#allocation2], 4
      %s30 = int_to_ptr.vmem [resolvable:$true] %s29
      %35 = dma.hbm_to_vmem [thread:$0]  %s28, 256, %s30, [#allocation3], 32, 32, 2
    $region5: #{tpu_custom_call.1} parent=1 // pred_fallthru
      _
    // Predicated region
    $region6: #{tpu_custom_call.1} parent=1 // pred_check
      _
    $region7: #{tpu_custom_call.1} parent=1 // pred_check_branch
      %37 = sbr.rel (0) target = $region9
    $region8: #{tpu_custom_call.1} parent=1 // pred_region
      %39 = vsyncadd [#allocation6], 0
      %s40 = sshll.u32 %s1, 4
      %s41 = int_to_ptr.hbm [resolvable:$true] %s40
      %s42 = sshll.u32 [#allocation5], 4
      %s43 = int_to_ptr.vmem [resolvable:$true] %s42
      %48 = dma.hbm_to_vmem [thread:$0]  %s41, 512, %s43, [#allocation6], 128, 128, 8
    $region9: #{tpu_custom_call.1} parent=1 // pred_fallthru
      _
    // Predicated region
    $region10: #{tpu_custom_call.1} parent=1 // pred_check
      _
    $region11: #{tpu_custom_call.1} parent=1 // pred_check_branch
      %50 = sbr.rel (0) target = $region13
    $region12: #{tpu_custom_call.1} parent=1 // pred_region
      %52 = vsyncadd [#allocation6], 0
      %s53 = sshll.u32 %s2, 4
      %s54 = int_to_ptr.hbm [resolvable:$true] %s53
      %s55 = sshll.u32 [#allocation7], 4
      %s56 = int_to_ptr.vmem [resolvable:$true] %s55
      %61 = dma.hbm_to_vmem [thread:$0]  %s54, 512, %s56, [#allocation6], 128, 128, 8
    $region13: #{tpu_custom_call.1} parent=1 // pred_fallthru
      _
    // Predicated region
    $region14: #{tpu_custom_call.1} parent=1 // pred_check
      _
    $region15: #{tpu_custom_call.1} parent=1 // pred_check_branch
      %63 = sbr.rel (0) target = $region17
    $region16: #{tpu_custom_call.1} parent=1 // pred_region
      %65 = vsyncadd [#allocation9], 0
      %s66 = sshll.u32 %s3, 4
      %s67 = int_to_ptr.hbm [resolvable:$true] %s66
      %s68 = sshll.u32 [#allocation8], 4
      %s69 = int_to_ptr.vmem [resolvable:$true] %s68
      %74 = dma.hbm_to_vmem [thread:$0]  %s67, 512, %s69, [#allocation9], 128, 128, 8
    $region17: #{tpu_custom_call.1} parent=1 // pred_fallthru
      _
    // Predicated region
    $region18: #{tpu_custom_call.1} parent=1 // pred_check
      _
    $region19: #{tpu_custom_call.1} parent=1 // pred_check_branch
      %76 = sbr.rel (0) target = $region21
    $region20: #{tpu_custom_call.1} parent=1 // pred_region
      _
    $region21: #{tpu_custom_call.1} parent=1 // pred_fallthru
      _
    // Predicated region
    $region22: #{tpu_custom_call.1} parent=1 // pred_check
      _
    $region23: #{tpu_custom_call.1} parent=1 // pred_check_branch
      %78 = sbr.rel (0) target = $region25
    $region24: #{tpu_custom_call.1} parent=1 // pred_region
      %80 = vsyncadd [#allocation9], 0
      %s81 = sshll.u32 %s5, 4
      %s82 = int_to_ptr.hbm [resolvable:$true] %s81
      %s83 = sshll.u32 [#allocation10], 4
      %s84 = int_to_ptr.vmem [resolvable:$true] %s83
      %89 = dma.hbm_to_vmem [thread:$0]  %s82, 512, %s84, [#allocation9], 128, 128, 8
    $region25: #{tpu_custom_call.1} parent=1 // pred_fallthru
      _
    // Predicated region
    $region26: #{tpu_custom_call.1} parent=1 // pred_check
      _
    $region27: #{tpu_custom_call.1} parent=1 // pred_check_branch
      %91 = sbr.rel (0) target = $region29
    $region28: #{tpu_custom_call.1} parent=1 // pred_region
      _
    $region29: #{tpu_custom_call.1} parent=1 // pred_fallthru
      _
    // Predicated region
    $region30: #{tpu_custom_call.1} parent=1 // pred_check
      _
    $region31: #{tpu_custom_call.1} parent=1 // pred_check_branch
      %93 = sbr.rel (0) target = $region33
    $region32: #{tpu_custom_call.1} parent=1 // pred_region
      _
    $region33: #{tpu_custom_call.1} parent=1 // pred_fallthru
      _
    // Predicated region
    $region34: #{tpu_custom_call.1} parent=1 // pred_check
      _
    $region35: #{tpu_custom_call.1} parent=1 // pred_check_branch
      %95 = sbr.rel (0) target = $region37
    $region36: #{tpu_custom_call.1} parent=1 // pred_region
      %97 = vsyncadd [#allocation12], 0
      %s98 = sshll.u32 %s8, 4
      %s99 = int_to_ptr.hbm [resolvable:$true] %s98
      %s100 = sshll.u32 [#allocation11], 4
      %s101 = int_to_ptr.vmem [resolvable:$true] %s100
      %106 = dma.hbm_to_vmem [thread:$0]  %s99, 64, %s101, [#allocation12], 32, 32, 2
    $region37: #{tpu_custom_call.1} parent=1 // pred_fallthru
      _
    // Predicated region
    $region38: #{tpu_custom_call.1} parent=1 // pred_check
      _
    $region39: #{tpu_custom_call.1} parent=1 // pred_check_branch
      %108 = sbr.rel (0) target = $region41
    $region40: #{tpu_custom_call.1} parent=1 // pred_region
      %110 = dma.done [#allocation3], 256
    $region41: #{tpu_custom_call.1} parent=1 // pred_fallthru
      _
    // Predicated region
    $region42: #{tpu_custom_call.1} parent=1 // pred_check
      _
    $region43: #{tpu_custom_call.1} parent=1 // pred_check_branch
      %112 = sbr.rel (0) target = $region45
    $region44: #{tpu_custom_call.1} parent=1 // pred_region
      %114 = dma.done [#allocation6], 512
    $region45: #{tpu_custom_call.1} parent=1 // pred_fallthru
      _
    // Predicated region
    $region46: #{tpu_custom_call.1} parent=1 // pred_check
      _
    $region47: #{tpu_custom_call.1} parent=1 // pred_check_branch
      %116 = sbr.rel (0) target = $region49
    $region48: #{tpu_custom_call.1} parent=1 // pred_region
      %118 = dma.done [#allocation6], 512
    $region49: #{tpu_custom_call.1} parent=1 // pred_fallthru
      _
    // Predicated region
    $region50: #{tpu_custom_call.1} parent=1 // pred_check
      _
    $region51: #{tpu_custom_call.1} parent=1 // pred_check_branch
      %120 = sbr.rel (0) target = $region53
    $region52: #{tpu_custom_call.1} parent=1 // pred_region
      %122 = dma.done [#allocation9], 512
    $region53: #{tpu_custom_call.1} parent=1 // pred_fallthru
      _
    // Predicated region
    $region54: #{tpu_custom_call.1} parent=1 // pred_check
      _
    $region55: #{tpu_custom_call.1} parent=1 // pred_check_branch
      %124 = sbr.rel (0) target = $region57
    $region56: #{tpu_custom_call.1} parent=1 // pred_region
      %126 = dma.done [#allocation9], 512
    $region57: #{tpu_custom_call.1} parent=1 // pred_fallthru
      _
    // Predicated region
    $region58: #{tpu_custom_call.1} parent=1 // pred_check
      _
    $region59: #{tpu_custom_call.1} parent=1 // pred_check_branch
      %128 = sbr.rel (0) target = $region61
    $region60: #{tpu_custom_call.1} parent=1 // pred_region
      %130 = dma.done [#allocation12], 64
    $region61: #{tpu_custom_call.1} parent=1 // pred_fallthru
      _
    %v131 = vld [vmem:[#allocation5] sm:$0xff]
    %v132 = vld [vmem:[#allocation5 + $0x8] sm:$0xff]
    %v133 = vld [vmem:[#allocation5 + $0x10] sm:$0xff]
    %v134 = vld [vmem:[#allocation5 + $0x18] sm:$0xff]
    %v135 = vld [vmem:[#allocation7] sm:$0xff]
    %v136 = vld [vmem:[#allocation7 + $0x8] sm:$0xff]
    %v137 = vld [vmem:[#allocation7 + $0x10] sm:$0xff]
    %v138 = vld [vmem:[#allocation7 + $0x18] sm:$0xff]
    %v139 = vld [vmem:[#allocation8] sm:$0xff]
    %v140 = vld [vmem:[#allocation8 + $0x8] sm:$0xff]
    %v141 = vld [vmem:[#allocation8 + $0x10] sm:$0xff]
    %v142 = vld [vmem:[#allocation8 + $0x18] sm:$0xff]
    %v143 = vld [vmem:[%s4] sm:$0x1]
    %v145 = vperm.slane %v143, 0
    %v147 = vld [vmem:[%s7] sm:$0x3]
    %v148 = vld [vmem:[#allocation11] sm:$0x3]
    %s149 = scalar_lea.vmem %s7, 2
    %v150 = vld [vmem:[%s149] sm:$0x3]
    %s151 = scalar_lea.vmem [#allocation11], 2
    %v152 = vld [vmem:[%s151] sm:$0x3]
    %vm153 = vcmask 261120
    %v155 = vsel %vm153, %v150, 0
    %157 = vmatpush.msra.mxu0 0.0
    %158 = vmatpush.msra.mxu0 0.0
    %159 = vmatpush.msra.mxu0 0.0
    %160 = vmatpush.msra.mxu0 0.0
    %161 = vmatpush.msra.mxu0 0.0
    %162 = vmatpush.msra.mxu0 0.0
    %163 = vmatpush.msra.mxu0 0.0
    %164 = vmatpush.msra.mxu0 0.0
    %165 = vmatpush.msra.mxu0 0.0
    %166 = vmatpush.msra.mxu0 0.0
    %167 = vmatpush.msra.mxu0 0.0
    %168 = vmatpush.msra.mxu0 0.0
    %169 = vmatpush.msra.mxu0 %v142
    %170 = vmatpush.msra.mxu0 %v141
    %171 = vmatpush.msra.mxu0 %v140
    %172 = vmatpush.msra.mxu0 %v139
    %173 = vmatmul.f32.gmra.mxu0 %v155
    %v174 = vpop.f32.mrf.mxu0
    %v175 = vadd.f32 0.0, %v174
    %176 = vdwg.mxu0
    %v177 = vld [vmem:[#allocation2] sm:$0x3]
    %v179 = vsel %vm153, %v147, 0
    %181 = vmatpush.msra.mxu0 0.0
    %182 = vmatpush.msra.mxu0 0.0
    %183 = vmatpush.msra.mxu0 0.0
    %184 = vmatpush.msra.mxu0 0.0
    %185 = vmatpush.msra.mxu0 0.0
    %186 = vmatpush.msra.mxu0 0.0
    %187 = vmatpush.msra.mxu0 0.0
    %188 = vmatpush.msra.mxu0 0.0
    %189 = vmatpush.msra.mxu0 0.0
    %190 = vmatpush.msra.mxu0 0.0
    %191 = vmatpush.msra.mxu0 0.0
    %192 = vmatpush.msra.mxu0 0.0
    %193 = vmatpush.msra.mxu0 %v134
    %194 = vmatpush.msra.mxu0 %v133
    %195 = vmatpush.msra.mxu0 %v132
    %196 = vmatpush.msra.mxu0 %v131
    %197 = vmatmul.f32.gmra.mxu0 %v179
    %v198 = vpop.f32.mrf.mxu0
    %v199 = vadd.f32 0.0, %v198
    %200 = vdwg.mxu0
    %v201 = vadd.f32 %v177, %v199
    %v202 = vxor.u32 %v201, 2147483648
    %v203 = vmul.f32 %v202, 1.442695
    %v204 = vpow.pop %v203
    %v205 = vadd.f32 %v204, 1.0
    %v206 = vrcp.pop %v205
    %v207 = vmul.f32 %v205, %v206
    %v208 = vsub.f32 1.0, %v207
    %v209 = vmul.f32 %v206, %v208
    %v210 = vadd.f32 %v206, %v209
    %vm211 = vweird.f32 %v205
    %vm212 = vweird.f32 %v206
    %vm213 = vmor %vm211, %vm212
    %v214 = vsel %vm213, %v206, %v210
    %v215 = vand.u32 2147483647, %v205
    %vm216 = vcmp.eq.f32.partialorder %v215, 8.507059e+37
    %v217 = vand.u32 %v205, 2147483648
    %v218 = vor.u32 1.1754944e-38, %v217
    %v219 = vsel %vm216, %v218, %v214
    %v220 = vmul.f32 1.0, %v219
    %v221 = vtanh.pop %v201
    %223 = vrot.lane.b32.xlu0 %v148, 32
    %v224 = vpop.permute.xlu0 %223
    %v226 = vmul.f32 %v220, %v224
    %228 = vrot.lane.b32.xlu0 %v221, 64
    %v229 = vpop.permute.xlu0 %228
    %v231 = vmul.f32 %v220, %v229
    %233 = vrot.lane.b32.xlu0 %v231, 32
    %v234 = vpop.permute.xlu0 %233
    %v236 = vadd.f32 %v226, %v234
    %v237 = vtanh.pop %v236
    %239 = vrot.lane.b32.xlu0 %v237, 64
    %v240 = vpop.permute.xlu0 %239
    %v242 = vmul.f32 %v220, %v240
    %244 = vrot.lane.b32.xlu0 %v242, 32
    %v245 = vpop.permute.xlu0 %244
    %v246 = vsel %vm153, %v245, 0
    %248 = vmatpush.msra.mxu0 0.0
    %249 = vmatpush.msra.mxu0 0.0
    %250 = vmatpush.msra.mxu0 0.0
    %251 = vmatpush.msra.mxu0 0.0
    %252 = vmatpush.msra.mxu0 0.0
    %253 = vmatpush.msra.mxu0 0.0
    %254 = vmatpush.msra.mxu0 0.0
    %255 = vmatpush.msra.mxu0 0.0
    %256 = vmatpush.msra.mxu0 0.0
    %257 = vmatpush.msra.mxu0 0.0
    %258 = vmatpush.msra.mxu0 0.0
    %259 = vmatpush.msra.mxu0 0.0
    %260 = vmatpush.msra.mxu0 %v138
    %261 = vmatpush.msra.mxu0 %v137
    %262 = vmatpush.msra.mxu0 %v136
    %263 = vmatpush.msra.mxu0 %v135
    %264 = vmatmul.f32.gmra.mxu0 %v246
    %v265 = vpop.f32.mrf.mxu0
    %v266 = vadd.f32 %v175, %v265
    %267 = vdwg.mxu0
    %v268 = vadd.f32 %v266, %v145
    %v269 = vxor.u32 %v268, 2147483648
    %v270 = vmul.f32 %v269, 1.442695
    %v271 = vpow.pop %v270
    %v272 = vadd.f32 %v271, 1.0
    %v273 = vrcp.pop %v272
    %v274 = vmul.f32 %v272, %v273
    %v275 = vsub.f32 1.0, %v274
    %v276 = vmul.f32 %v273, %v275
    %v277 = vadd.f32 %v273, %v276
    %vm278 = vweird.f32 %v272
    %vm279 = vweird.f32 %v273
    %vm280 = vmor %vm278, %vm279
    %v281 = vsel %vm280, %v273, %v277
    %v282 = vand.u32 2147483647, %v272
    %vm283 = vcmp.eq.f32.partialorder %v282, 8.507059e+37
    %v284 = vand.u32 %v272, 2147483648
    %v285 = vor.u32 1.1754944e-38, %v284
    %v286 = vsel %vm283, %v285, %v281
    %v287 = vmul.f32 1.0, %v286
    %v288 = vtanh.pop %v268
    %290 = vrot.lane.b32.xlu0 %v152, 32
    %v291 = vpop.permute.xlu0 %290
    %v293 = vmul.f32 %v287, %v291
    %295 = vrot.lane.b32.xlu0 %v288, 64
    %v296 = vpop.permute.xlu0 %295
    %v298 = vmul.f32 %v287, %v296
    %300 = vrot.lane.b32.xlu0 %v298, 32
    %v301 = vpop.permute.xlu0 %300
    %v303 = vadd.f32 %v293, %v301
    %v304 = vtanh.pop %v303
    %306 = vrot.lane.b32.xlu0 %v304, 64
    %v307 = vpop.permute.xlu0 %306
    %v309 = vmul.f32 %v287, %v307
    %311 = vrot.lane.b32.xlu0 %v309, 32
    %v312 = vpop.permute.xlu0 %311
    %v313 = vsel %vm153, %v312, 0
    %315 = vmatpush.msra.mxu0 0.0
    %316 = vmatpush.msra.mxu0 0.0
    %317 = vmatpush.msra.mxu0 0.0
    %318 = vmatpush.msra.mxu0 0.0
    %319 = vmatpush.msra.mxu0 0.0
    %320 = vmatpush.msra.mxu0 0.0
    %321 = vmatpush.msra.mxu0 0.0
    %322 = vmatpush.msra.mxu0 0.0
    %323 = vmatpush.msra.mxu0 0.0
    %324 = vmatpush.msra.mxu0 0.0
    %325 = vmatpush.msra.mxu0 0.0
    %326 = vmatpush.msra.mxu0 0.0
    %327 = vmatpush.msra.mxu0 %v142
    %328 = vmatpush.msra.mxu0 %v141
    %329 = vmatpush.msra.mxu0 %v140
    %330 = vmatpush.msra.mxu0 %v139
    %331 = vmatmul.f32.gmra.mxu0 %v313
    %v332 = vpop.f32.mrf.mxu0
    %v333 = vadd.f32 0.0, %v332
    %334 = vdwg.mxu0
    %s335 = scalar_lea.vmem [#allocation2], 2
    %v336 = vld [vmem:[%s335] sm:$0x3]
    %337 = vmatpush.msra.mxu0 0.0
    %338 = vmatpush.msra.mxu0 0.0
    %339 = vmatpush.msra.mxu0 0.0
    %340 = vmatpush.msra.mxu0 0.0
    %341 = vmatpush.msra.mxu0 0.0
    %342 = vmatpush.msra.mxu0 0.0
    %343 = vmatpush.msra.mxu0 0.0
    %344 = vmatpush.msra.mxu0 0.0
    %345 = vmatpush.msra.mxu0 0.0
    %346 = vmatpush.msra.mxu0 0.0
    %347 = vmatpush.msra.mxu0 0.0
    %348 = vmatpush.msra.mxu0 0.0
    %349 = vmatpush.msra.mxu0 %v134
    %350 = vmatpush.msra.mxu0 %v133
    %351 = vmatpush.msra.mxu0 %v132
    %352 = vmatpush.msra.mxu0 %v131
    %353 = vmatmul.f32.gmra.mxu0 %v246
    %v354 = vpop.f32.mrf.mxu0
    %v355 = vadd.f32 0.0, %v354
    %356 = vdwg.mxu0
    %v357 = vadd.f32 %v336, %v355
    %v358 = vxor.u32 %v357, 2147483648
    %v359 = vmul.f32 %v358, 1.442695
    %v360 = vpow.pop %v359
    %v361 = vadd.f32 %v360, 1.0
    %v362 = vrcp.pop %v361
    %v363 = vmul.f32 %v361, %v362
    %v364 = vsub.f32 1.0, %v363
    %v365 = vmul.f32 %v362, %v364
    %v366 = vadd.f32 %v362, %v365
    %vm367 = vweird.f32 %v361
    %vm368 = vweird.f32 %v362
    %vm369 = vmor %vm367, %vm368
    %v370 = vsel %vm369, %v362, %v366
    %v371 = vand.u32 2147483647, %v361
    %vm372 = vcmp.eq.f32.partialorder %v371, 8.507059e+37
    %v373 = vand.u32 %v361, 2147483648
    %v374 = vor.u32 1.1754944e-38, %v373
    %v375 = vsel %vm372, %v374, %v370
    %v376 = vmul.f32 1.0, %v375
    %v377 = vtanh.pop %v357
    %v378 = vmul.f32 %v376, %v236
    %380 = vrot.lane.b32.xlu0 %v377, 64
    %v381 = vpop.permute.xlu0 %380
    %v383 = vmul.f32 %v376, %v381
    %385 = vrot.lane.b32.xlu0 %v383, 32
    %v386 = vpop.permute.xlu0 %385
    %v388 = vadd.f32 %v378, %v386
    %v389 = vtanh.pop %v388
    %391 = vrot.lane.b32.xlu0 %v389, 64
    %v392 = vpop.permute.xlu0 %391
    %v394 = vmul.f32 %v376, %v392
    %396 = vrot.lane.b32.xlu0 %v394, 32
    %v397 = vpop.permute.xlu0 %396
    %v398 = vsel %vm153, %v397, 0
    %400 = vmatpush.msra.mxu0 0.0
    %401 = vmatpush.msra.mxu0 0.0
    %402 = vmatpush.msra.mxu0 0.0
    %403 = vmatpush.msra.mxu0 0.0
    %404 = vmatpush.msra.mxu0 0.0
    %405 = vmatpush.msra.mxu0 0.0
    %406 = vmatpush.msra.mxu0 0.0
    %407 = vmatpush.msra.mxu0 0.0
    %408 = vmatpush.msra.mxu0 0.0
    %409 = vmatpush.msra.mxu0 0.0
    %410 = vmatpush.msra.mxu0 0.0
    %411 = vmatpush.msra.mxu0 0.0
    %412 = vmatpush.msra.mxu0 %v138
    %413 = vmatpush.msra.mxu0 %v137
    %414 = vmatpush.msra.mxu0 %v136
    %415 = vmatpush.msra.mxu0 %v135
    %416 = vmatmul.f32.gmra.mxu0 %v398
    %v417 = vpop.f32.mrf.mxu0
    %v418 = vadd.f32 %v333, %v417
    %419 = vdwg.mxu0
    %v420 = vadd.f32 %v418, %v145
    %v421 = vxor.u32 %v420, 2147483648
    %v422 = vmul.f32 %v421, 1.442695
    %v423 = vpow.pop %v422
    %v424 = vadd.f32 %v423, 1.0
    %v425 = vrcp.pop %v424
    %v426 = vmul.f32 %v424, %v425
    %v427 = vsub.f32 1.0, %v426
    %v428 = vmul.f32 %v425, %v427
    %v429 = vadd.f32 %v425, %v428
    %vm430 = vweird.f32 %v424
    %vm431 = vweird.f32 %v425
    %vm432 = vmor %vm430, %vm431
    %v433 = vsel %vm432, %v425, %v429
    %v434 = vand.u32 2147483647, %v424
    %vm435 = vcmp.eq.f32.partialorder %v434, 8.507059e+37
    %v436 = vand.u32 %v424, 2147483648
    %v437 = vor.u32 1.1754944e-38, %v436
    %v438 = vsel %vm435, %v437, %v433
    %v439 = vmul.f32 1.0, %v438
    %v440 = vtanh.pop %v420
    %v441 = vmul.f32 %v439, %v303
    %443 = vrot.lane.b32.xlu0 %v440, 64
    %v444 = vpop.permute.xlu0 %443
    %v446 = vmul.f32 %v439, %v444
    %448 = vrot.lane.b32.xlu0 %v446, 32
    %v449 = vpop.permute.xlu0 %448
    %v451 = vadd.f32 %v441, %v449
    %v452 = vtanh.pop %v451
    %454 = vrot.lane.b32.xlu0 %v452, 64
    %v455 = vpop.permute.xlu0 %454
    %v457 = vmul.f32 %v439, %v455
    %459 = vrot.lane.b32.xlu0 %v457, 32
    %v460 = vpop.permute.xlu0 %459
    %v461 = vsel %vm153, %v460, 0
    %463 = vmatpush.msra.mxu0 0.0
    %464 = vmatpush.msra.mxu0 0.0
    %465 = vmatpush.msra.mxu0 0.0
    %466 = vmatpush.msra.mxu0 0.0
    %467 = vmatpush.msra.mxu0 0.0
    %468 = vmatpush.msra.mxu0 0.0
    %469 = vmatpush.msra.mxu0 0.0
    %470 = vmatpush.msra.mxu0 0.0
    %471 = vmatpush.msra.mxu0 0.0
    %472 = vmatpush.msra.mxu0 0.0
    %473 = vmatpush.msra.mxu0 0.0
    %474 = vmatpush.msra.mxu0 0.0
    %475 = vmatpush.msra.mxu0 %v142
    %476 = vmatpush.msra.mxu0 %v141
    %477 = vmatpush.msra.mxu0 %v140
    %478 = vmatpush.msra.mxu0 %v139
    %479 = vmatmul.f32.gmra.mxu0 %v461
    %v480 = vpop.f32.mrf.mxu0
    %v481 = vadd.f32 0.0, %v480
    %482 = vdwg.mxu0
    %s483 = scalar_lea.vmem [#allocation2], 4
    %v484 = vld [vmem:[%s483] sm:$0x3]
    %485 = vmatpush.msra.mxu0 0.0
    %486 = vmatpush.msra.mxu0 0.0
    %487 = vmatpush.msra.mxu0 0.0
    %488 = vmatpush.msra.mxu0 0.0
    %489 = vmatpush.msra.mxu0 0.0
    %490 = vmatpush.msra.mxu0 0.0
    %491 = vmatpush.msra.mxu0 0.0
    %492 = vmatpush.msra.mxu0 0.0
    %493 = vmatpush.msra.mxu0 0.0
    %494 = vmatpush.msra.mxu0 0.0
    %495 = vmatpush.msra.mxu0 0.0
    %496 = vmatpush.msra.mxu0 0.0
    %497 = vmatpush.msra.mxu0 %v134
    %498 = vmatpush.msra.mxu0 %v133
    %499 = vmatpush.msra.mxu0 %v132
    %500 = vmatpush.msra.mxu0 %v131
    %501 = vmatmul.f32.gmra.mxu0 %v398
    %v502 = vpop.f32.mrf.mxu0
    %v503 = vadd.f32 0.0, %v502
    %504 = vdwg.mxu0
    %v505 = vadd.f32 %v484, %v503
    %v506 = vxor.u32 %v505, 2147483648
    %v507 = vmul.f32 %v506, 1.442695
    %v508 = vpow.pop %v507
    %v509 = vadd.f32 %v508, 1.0
    %v510 = vrcp.pop %v509
    %v511 = vmul.f32 %v509, %v510
    %v512 = vsub.f32 1.0, %v511
    %v513 = vmul.f32 %v510, %v512
    %v514 = vadd.f32 %v510, %v513
    %vm515 = vweird.f32 %v509
    %vm516 = vweird.f32 %v510
    %vm517 = vmor %vm515, %vm516
    %v518 = vsel %vm517, %v510, %v514
    %v519 = vand.u32 2147483647, %v509
    %vm520 = vcmp.eq.f32.partialorder %v519, 8.507059e+37
    %v521 = vand.u32 %v509, 2147483648
    %v522 = vor.u32 1.1754944e-38, %v521
    %v523 = vsel %vm520, %v522, %v518
    %v524 = vmul.f32 1.0, %v523
    %v525 = vtanh.pop %v505
    %v526 = vmul.f32 %v524, %v388
    %528 = vrot.lane.b32.xlu0 %v525, 64
    %v529 = vpop.permute.xlu0 %528
    %v531 = vmul.f32 %v524, %v529
    %533 = vrot.lane.b32.xlu0 %v531, 32
    %v534 = vpop.permute.xlu0 %533
    %v536 = vadd.f32 %v526, %v534
    %v537 = vtanh.pop %v536
    %539 = vrot.lane.b32.xlu0 %v537, 64
    %v540 = vpop.permute.xlu0 %539
    %v542 = vmul.f32 %v524, %v540
    %544 = vrot.lane.b32.xlu0 %v542, 32
    %v545 = vpop.permute.xlu0 %544
    %v546 = vsel %vm153, %v545, 0
    %548 = vmatpush.msra.mxu0 0.0
    %549 = vmatpush.msra.mxu0 0.0
    %550 = vmatpush.msra.mxu0 0.0
    %551 = vmatpush.msra.mxu0 0.0
    %552 = vmatpush.msra.mxu0 0.0
    %553 = vmatpush.msra.mxu0 0.0
    %554 = vmatpush.msra.mxu0 0.0
    %555 = vmatpush.msra.mxu0 0.0
    %556 = vmatpush.msra.mxu0 0.0
    %557 = vmatpush.msra.mxu0 0.0
    %558 = vmatpush.msra.mxu0 0.0
    %559 = vmatpush.msra.mxu0 0.0
    %560 = vmatpush.msra.mxu0 %v138
    %561 = vmatpush.msra.mxu0 %v137
    %562 = vmatpush.msra.mxu0 %v136
    %563 = vmatpush.msra.mxu0 %v135
    %564 = vmatmul.f32.gmra.mxu0 %v546
    %v565 = vpop.f32.mrf.mxu0
    %v566 = vadd.f32 %v481, %v565
    %567 = vdwg.mxu0
    %v568 = vadd.f32 %v566, %v145
    %v569 = vxor.u32 %v568, 2147483648
    %v570 = vmul.f32 %v569, 1.442695
    %v571 = vpow.pop %v570
    %v572 = vadd.f32 %v571, 1.0
    %v573 = vrcp.pop %v572
    %v574 = vmul.f32 %v572, %v573
    %v575 = vsub.f32 1.0, %v574
    %v576 = vmul.f32 %v573, %v575
    %v577 = vadd.f32 %v573, %v576
    %vm578 = vweird.f32 %v572
    %vm579 = vweird.f32 %v573
    %vm580 = vmor %vm578, %vm579
    %v581 = vsel %vm580, %v573, %v577
    %v582 = vand.u32 2147483647, %v572
    %vm583 = vcmp.eq.f32.partialorder %v582, 8.507059e+37
    %v584 = vand.u32 %v572, 2147483648
    %v585 = vor.u32 1.1754944e-38, %v584
    %v586 = vsel %vm583, %v585, %v581
    %v587 = vmul.f32 1.0, %v586
    %v588 = vtanh.pop %v568
    %v589 = vmul.f32 %v587, %v451
    %591 = vrot.lane.b32.xlu0 %v588, 64
    %v592 = vpop.permute.xlu0 %591
    %v594 = vmul.f32 %v587, %v592
    %596 = vrot.lane.b32.xlu0 %v594, 32
    %v597 = vpop.permute.xlu0 %596
    %v599 = vadd.f32 %v589, %v597
    %v600 = vtanh.pop %v599
    %602 = vrot.lane.b32.xlu0 %v600, 64
    %v603 = vpop.permute.xlu0 %602
    %v605 = vmul.f32 %v587, %v603
    %607 = vrot.lane.b32.xlu0 %v605, 32
    %v608 = vpop.permute.xlu0 %607
    %v609 = vsel %vm153, %v608, 0
    %611 = vmatpush.msra.mxu0 0.0
    %612 = vmatpush.msra.mxu0 0.0
    %613 = vmatpush.msra.mxu0 0.0
    %614 = vmatpush.msra.mxu0 0.0
    %615 = vmatpush.msra.mxu0 0.0
    %616 = vmatpush.msra.mxu0 0.0
    %617 = vmatpush.msra.mxu0 0.0
    %618 = vmatpush.msra.mxu0 0.0
    %619 = vmatpush.msra.mxu0 0.0
    %620 = vmatpush.msra.mxu0 0.0
    %621 = vmatpush.msra.mxu0 0.0
    %622 = vmatpush.msra.mxu0 0.0
    %623 = vmatpush.msra.mxu0 %v142
    %624 = vmatpush.msra.mxu0 %v141
    %625 = vmatpush.msra.mxu0 %v140
    %626 = vmatpush.msra.mxu0 %v139
    %627 = vmatmul.f32.gmra.mxu0 %v609
    %v628 = vpop.f32.mrf.mxu0
    %v629 = vadd.f32 0.0, %v628
    %630 = vdwg.mxu0
    %s631 = scalar_lea.vmem [#allocation2], 6
    %v632 = vld [vmem:[%s631] sm:$0x3]
    %633 = vmatpush.msra.mxu0 0.0
    %634 = vmatpush.msra.mxu0 0.0
    %635 = vmatpush.msra.mxu0 0.0
    %636 = vmatpush.msra.mxu0 0.0
    %637 = vmatpush.msra.mxu0 0.0
    %638 = vmatpush.msra.mxu0 0.0
    %639 = vmatpush.msra.mxu0 0.0
    %640 = vmatpush.msra.mxu0 0.0
    %641 = vmatpush.msra.mxu0 0.0
    %642 = vmatpush.msra.mxu0 0.0
    %643 = vmatpush.msra.mxu0 0.0
    %644 = vmatpush.msra.mxu0 0.0
    %645 = vmatpush.msra.mxu0 %v134
    %646 = vmatpush.msra.mxu0 %v133
    %647 = vmatpush.msra.mxu0 %v132
    %648 = vmatpush.msra.mxu0 %v131
    %649 = vmatmul.f32.gmra.mxu0 %v546
    %v650 = vpop.f32.mrf.mxu0
    %v651 = vadd.f32 0.0, %v650
    %652 = vdwg.mxu0
    %v653 = vadd.f32 %v632, %v651
    %v654 = vxor.u32 %v653, 2147483648
    %v655 = vmul.f32 %v654, 1.442695
    %v656 = vpow.pop %v655
    %v657 = vadd.f32 %v656, 1.0
    %v658 = vrcp.pop %v657
    %v659 = vmul.f32 %v657, %v658
    %v660 = vsub.f32 1.0, %v659
    %v661 = vmul.f32 %v658, %v660
    %v662 = vadd.f32 %v658, %v661
    %vm663 = vweird.f32 %v657
    %vm664 = vweird.f32 %v658
    %vm665 = vmor %vm663, %vm664
    %v666 = vsel %vm665, %v658, %v662
    %v667 = vand.u32 2147483647, %v657
    %vm668 = vcmp.eq.f32.partialorder %v667, 8.507059e+37
    %v669 = vand.u32 %v657, 2147483648
    %v670 = vor.u32 1.1754944e-38, %v669
    %v671 = vsel %vm668, %v670, %v666
    %v672 = vmul.f32 1.0, %v671
    %v673 = vtanh.pop %v653
    %v674 = vmul.f32 %v672, %v536
    %676 = vrot.lane.b32.xlu0 %v673, 64
    %v677 = vpop.permute.xlu0 %676
    %v679 = vmul.f32 %v672, %v677
    %681 = vrot.lane.b32.xlu0 %v679, 32
    %v682 = vpop.permute.xlu0 %681
    %v684 = vadd.f32 %v674, %v682
    %v685 = vtanh.pop %v684
    %687 = vrot.lane.b32.xlu0 %v685, 64
    %v688 = vpop.permute.xlu0 %687
    %v690 = vmul.f32 %v672, %v688
    %692 = vrot.lane.b32.xlu0 %v690, 32
    %v693 = vpop.permute.xlu0 %692
    %v694 = vsel %vm153, %v693, 0
    %696 = vmatpush.msra.mxu0 0.0
    %697 = vmatpush.msra.mxu0 0.0
    %698 = vmatpush.msra.mxu0 0.0
    %699 = vmatpush.msra.mxu0 0.0
    %700 = vmatpush.msra.mxu0 0.0
    %701 = vmatpush.msra.mxu0 0.0
    %702 = vmatpush.msra.mxu0 0.0
    %703 = vmatpush.msra.mxu0 0.0
    %704 = vmatpush.msra.mxu0 0.0
    %705 = vmatpush.msra.mxu0 0.0
    %706 = vmatpush.msra.mxu0 0.0
    %707 = vmatpush.msra.mxu0 0.0
    %708 = vmatpush.msra.mxu0 %v138
    %709 = vmatpush.msra.mxu0 %v137
    %710 = vmatpush.msra.mxu0 %v136
    %711 = vmatpush.msra.mxu0 %v135
    %712 = vmatmul.f32.gmra.mxu0 %v694
    %v713 = vpop.f32.mrf.mxu0
    %v714 = vadd.f32 %v629, %v713
    %715 = vdwg.mxu0
    %v716 = vadd.f32 %v714, %v145
    %v717 = vxor.u32 %v716, 2147483648
    %v718 = vmul.f32 %v717, 1.442695
    %v719 = vpow.pop %v718
    %v720 = vadd.f32 %v719, 1.0
    %v721 = vrcp.pop %v720
    %v722 = vmul.f32 %v720, %v721
    %v723 = vsub.f32 1.0, %v722
    %v724 = vmul.f32 %v721, %v723
    %v725 = vadd.f32 %v721, %v724
    %vm726 = vweird.f32 %v720
    %vm727 = vweird.f32 %v721
    %vm728 = vmor %vm726, %vm727
    %v729 = vsel %vm728, %v721, %v725
    %v730 = vand.u32 2147483647, %v720
    %vm731 = vcmp.eq.f32.partialorder %v730, 8.507059e+37
    %v732 = vand.u32 %v720, 2147483648
    %v733 = vor.u32 1.1754944e-38, %v732
    %v734 = vsel %vm731, %v733, %v729
    %v735 = vmul.f32 1.0, %v734
    %v736 = vtanh.pop %v716
    %v737 = vmul.f32 %v735, %v599
    %739 = vrot.lane.b32.xlu0 %v736, 64
    %v740 = vpop.permute.xlu0 %739
    %v742 = vmul.f32 %v735, %v740
    %744 = vrot.lane.b32.xlu0 %v742, 32
    %v745 = vpop.permute.xlu0 %744
    %v747 = vadd.f32 %v737, %v745
    %v748 = vtanh.pop %v747
    %750 = vrot.lane.b32.xlu0 %v748, 64
    %v751 = vpop.permute.xlu0 %750
    %v753 = vmul.f32 %v735, %v751
    %755 = vrot.lane.b32.xlu0 %v753, 32
    %v756 = vpop.permute.xlu0 %755
    %v757 = vsel %vm153, %v756, 0
    %759 = vmatpush.msra.mxu0 0.0
    %760 = vmatpush.msra.mxu0 0.0
    %761 = vmatpush.msra.mxu0 0.0
    %762 = vmatpush.msra.mxu0 0.0
    %763 = vmatpush.msra.mxu0 0.0
    %764 = vmatpush.msra.mxu0 0.0
    %765 = vmatpush.msra.mxu0 0.0
    %766 = vmatpush.msra.mxu0 0.0
    %767 = vmatpush.msra.mxu0 0.0
    %768 = vmatpush.msra.mxu0 0.0
    %769 = vmatpush.msra.mxu0 0.0
    %770 = vmatpush.msra.mxu0 0.0
    %771 = vmatpush.msra.mxu0 %v142
    %772 = vmatpush.msra.mxu0 %v141
    %773 = vmatpush.msra.mxu0 %v140
    %774 = vmatpush.msra.mxu0 %v139
    %775 = vmatmul.f32.gmra.mxu0 %v757
    %v776 = vpop.f32.mrf.mxu0
    %v777 = vadd.f32 0.0, %v776
    %778 = vdwg.mxu0
    %s779 = scalar_lea.vmem [#allocation2], 8
    %v780 = vld [vmem:[%s779] sm:$0x3]
    %781 = vmatpush.msra.mxu0 0.0
    %782 = vmatpush.msra.mxu0 0.0
    %783 = vmatpush.msra.mxu0 0.0
    %784 = vmatpush.msra.mxu0 0.0
    %785 = vmatpush.msra.mxu0 0.0
    %786 = vmatpush.msra.mxu0 0.0
    %787 = vmatpush.msra.mxu0 0.0
    %788 = vmatpush.msra.mxu0 0.0
    %789 = vmatpush.msra.mxu0 0.0
    %790 = vmatpush.msra.mxu0 0.0
    %791 = vmatpush.msra.mxu0 0.0
    %792 = vmatpush.msra.mxu0 0.0
    %793 = vmatpush.msra.mxu0 %v134
    %794 = vmatpush.msra.mxu0 %v133
    %795 = vmatpush.msra.mxu0 %v132
    %796 = vmatpush.msra.mxu0 %v131
    %797 = vmatmul.f32.gmra.mxu0 %v694
    %v798 = vpop.f32.mrf.mxu0
    %v799 = vadd.f32 0.0, %v798
    %800 = vdwg.mxu0
    %v801 = vadd.f32 %v780, %v799
    %v802 = vxor.u32 %v801, 2147483648
    %v803 = vmul.f32 %v802, 1.442695
    %v804 = vpow.pop %v803
    %v805 = vadd.f32 %v804, 1.0
    %v806 = vrcp.pop %v805
    %v807 = vmul.f32 %v805, %v806
    %v808 = vsub.f32 1.0, %v807
    %v809 = vmul.f32 %v806, %v808
    %v810 = vadd.f32 %v806, %v809
    %vm811 = vweird.f32 %v805
    %vm812 = vweird.f32 %v806
    %vm813 = vmor %vm811, %vm812
    %v814 = vsel %vm813, %v806, %v810
    %v815 = vand.u32 2147483647, %v805
    %vm816 = vcmp.eq.f32.partialorder %v815, 8.507059e+37
    %v817 = vand.u32 %v805, 2147483648
    %v818 = vor.u32 1.1754944e-38, %v817
    %v819 = vsel %vm816, %v818, %v814
    %v820 = vmul.f32 1.0, %v819
    %v821 = vtanh.pop %v801
    %v822 = vmul.f32 %v820, %v684
    %824 = vrot.lane.b32.xlu0 %v821, 64
    %v825 = vpop.permute.xlu0 %824
    %v827 = vmul.f32 %v820, %v825
    %829 = vrot.lane.b32.xlu0 %v827, 32
    %v830 = vpop.permute.xlu0 %829
    %v832 = vadd.f32 %v822, %v830
    %v833 = vtanh.pop %v832
    %835 = vrot.lane.b32.xlu0 %v833, 64
    %v836 = vpop.permute.xlu0 %835
    %v838 = vmul.f32 %v820, %v836
    %840 = vrot.lane.b32.xlu0 %v838, 32
    %v841 = vpop.permute.xlu0 %840
    %v842 = vsel %vm153, %v841, 0
    %844 = vmatpush.msra.mxu0 0.0
    %845 = vmatpush.msra.mxu0 0.0
    %846 = vmatpush.msra.mxu0 0.0
    %847 = vmatpush.msra.mxu0 0.0
    %848 = vmatpush.msra.mxu0 0.0
    %849 = vmatpush.msra.mxu0 0.0
    %850 = vmatpush.msra.mxu0 0.0
    %851 = vmatpush.msra.mxu0 0.0
    %852 = vmatpush.msra.mxu0 0.0
    %853 = vmatpush.msra.mxu0 0.0
    %854 = vmatpush.msra.mxu0 0.0
    %855 = vmatpush.msra.mxu0 0.0
    %856 = vmatpush.msra.mxu0 %v138
    %857 = vmatpush.msra.mxu0 %v137
    %858 = vmatpush.msra.mxu0 %v136
    %859 = vmatpush.msra.mxu0 %v135
    %860 = vmatmul.f32.gmra.mxu0 %v842
    %v861 = vpop.f32.mrf.mxu0
    %v862 = vadd.f32 %v777, %v861
    %863 = vdwg.mxu0
    %v864 = vadd.f32 %v862, %v145
    %v865 = vxor.u32 %v864, 2147483648
    %v866 = vmul.f32 %v865, 1.442695
    %v867 = vpow.pop %v866
    %v868 = vadd.f32 %v867, 1.0
    %v869 = vrcp.pop %v868
    %v870 = vmul.f32 %v868, %v869
    %v871 = vsub.f32 1.0, %v870
    %v872 = vmul.f32 %v869, %v871
    %v873 = vadd.f32 %v869, %v872
    %vm874 = vweird.f32 %v868
    %vm875 = vweird.f32 %v869
    %vm876 = vmor %vm874, %vm875
    %v877 = vsel %vm876, %v869, %v873
    %v878 = vand.u32 2147483647, %v868
    %vm879 = vcmp.eq.f32.partialorder %v878, 8.507059e+37
    %v880 = vand.u32 %v868, 2147483648
    %v881 = vor.u32 1.1754944e-38, %v880
    %v882 = vsel %vm879, %v881, %v877
    %v883 = vmul.f32 1.0, %v882
    %v884 = vtanh.pop %v864
    %v885 = vmul.f32 %v883, %v747
    %887 = vrot.lane.b32.xlu0 %v884, 64
    %v888 = vpop.permute.xlu0 %887
    %v890 = vmul.f32 %v883, %v888
    %892 = vrot.lane.b32.xlu0 %v890, 32
    %v893 = vpop.permute.xlu0 %892
    %v895 = vadd.f32 %v885, %v893
    %v896 = vtanh.pop %v895
    %898 = vrot.lane.b32.xlu0 %v896, 64
    %v899 = vpop.permute.xlu0 %898
    %v901 = vmul.f32 %v883, %v899
    %903 = vrot.lane.b32.xlu0 %v901, 32
    %v904 = vpop.permute.xlu0 %903
    %v905 = vsel %vm153, %v904, 0
    %907 = vmatpush.msra.mxu0 0.0
    %908 = vmatpush.msra.mxu0 0.0
    %909 = vmatpush.msra.mxu0 0.0
    %910 = vmatpush.msra.mxu0 0.0
    %911 = vmatpush.msra.mxu0 0.0
    %912 = vmatpush.msra.mxu0 0.0
    %913 = vmatpush.msra.mxu0 0.0
    %914 = vmatpush.msra.mxu0 0.0
    %915 = vmatpush.msra.mxu0 0.0
    %916 = vmatpush.msra.mxu0 0.0
    %917 = vmatpush.msra.mxu0 0.0
    %918 = vmatpush.msra.mxu0 0.0
    %919 = vmatpush.msra.mxu0 %v142
    %920 = vmatpush.msra.mxu0 %v141
    %921 = vmatpush.msra.mxu0 %v140
    %922 = vmatpush.msra.mxu0 %v139
    %923 = vmatmul.f32.gmra.mxu0 %v905
    %v924 = vpop.f32.mrf.mxu0
    %v925 = vadd.f32 0.0, %v924
    %926 = vdwg.mxu0
    %s927 = scalar_lea.vmem [#allocation2], 10
    %v928 = vld [vmem:[%s927] sm:$0x3]
    %929 = vmatpush.msra.mxu0 0.0
    %930 = vmatpush.msra.mxu0 0.0
    %931 = vmatpush.msra.mxu0 0.0
    %932 = vmatpush.msra.mxu0 0.0
    %933 = vmatpush.msra.mxu0 0.0
    %934 = vmatpush.msra.mxu0 0.0
    %935 = vmatpush.msra.mxu0 0.0
    %936 = vmatpush.msra.mxu0 0.0
    %937 = vmatpush.msra.mxu0 0.0
    %938 = vmatpush.msra.mxu0 0.0
    %939 = vmatpush.msra.mxu0 0.0
    %940 = vmatpush.msra.mxu0 0.0
    %941 = vmatpush.msra.mxu0 %v134
    %942 = vmatpush.msra.mxu0 %v133
    %943 = vmatpush.msra.mxu0 %v132
    %944 = vmatpush.msra.mxu0 %v131
    %945 = vmatmul.f32.gmra.mxu0 %v842
    %v946 = vpop.f32.mrf.mxu0
    %v947 = vadd.f32 0.0, %v946
    %948 = vdwg.mxu0
    %v949 = vadd.f32 %v928, %v947
    %v950 = vxor.u32 %v949, 2147483648
    %v951 = vmul.f32 %v950, 1.442695
    %v952 = vpow.pop %v951
    %v953 = vadd.f32 %v952, 1.0
    %v954 = vrcp.pop %v953
    %v955 = vmul.f32 %v953, %v954
    %v956 = vsub.f32 1.0, %v955
    %v957 = vmul.f32 %v954, %v956
    %v958 = vadd.f32 %v954, %v957
    %vm959 = vweird.f32 %v953
    %vm960 = vweird.f32 %v954
    %vm961 = vmor %vm959, %vm960
    %v962 = vsel %vm961, %v954, %v958
    %v963 = vand.u32 2147483647, %v953
    %vm964 = vcmp.eq.f32.partialorder %v963, 8.507059e+37
    %v965 = vand.u32 %v953, 2147483648
    %v966 = vor.u32 1.1754944e-38, %v965
    %v967 = vsel %vm964, %v966, %v962
    %v968 = vmul.f32 1.0, %v967
    %v969 = vtanh.pop %v949
    %v970 = vmul.f32 %v968, %v832
    %972 = vrot.lane.b32.xlu0 %v969, 64
    %v973 = vpop.permute.xlu0 %972
    %v975 = vmul.f32 %v968, %v973
    %977 = vrot.lane.b32.xlu0 %v975, 32
    %v978 = vpop.permute.xlu0 %977
    %v980 = vadd.f32 %v970, %v978
    %v981 = vtanh.pop %v980
    %983 = vrot.lane.b32.xlu0 %v981, 64
    %v984 = vpop.permute.xlu0 %983
    %v986 = vmul.f32 %v968, %v984
    %988 = vrot.lane.b32.xlu0 %v986, 32
    %v989 = vpop.permute.xlu0 %988
    %v990 = vsel %vm153, %v989, 0
    %992 = vmatpush.msra.mxu0 0.0
    %993 = vmatpush.msra.mxu0 0.0
    %994 = vmatpush.msra.mxu0 0.0
    %995 = vmatpush.msra.mxu0 0.0
    %996 = vmatpush.msra.mxu0 0.0
    %997 = vmatpush.msra.mxu0 0.0
    %998 = vmatpush.msra.mxu0 0.0
    %999 = vmatpush.msra.mxu0 0.0
    %1000 = vmatpush.msra.mxu0 0.0
    %1001 = vmatpush.msra.mxu0 0.0
    %1002 = vmatpush.msra.mxu0 0.0
    %1003 = vmatpush.msra.mxu0 0.0
    %1004 = vmatpush.msra.mxu0 %v138
    %1005 = vmatpush.msra.mxu0 %v137
    %1006 = vmatpush.msra.mxu0 %v136
    %1007 = vmatpush.msra.mxu0 %v135
    %1008 = vmatmul.f32.gmra.mxu0 %v990
    %v1009 = vpop.f32.mrf.mxu0
    %v1010 = vadd.f32 %v925, %v1009
    %1011 = vdwg.mxu0
    %v1012 = vadd.f32 %v1010, %v145
    %v1013 = vxor.u32 %v1012, 2147483648
    %v1014 = vmul.f32 %v1013, 1.442695
    %v1015 = vpow.pop %v1014
    %v1016 = vadd.f32 %v1015, 1.0
    %v1017 = vrcp.pop %v1016
    %v1018 = vmul.f32 %v1016, %v1017
    %v1019 = vsub.f32 1.0, %v1018
    %v1020 = vmul.f32 %v1017, %v1019
    %v1021 = vadd.f32 %v1017, %v1020
    %vm1022 = vweird.f32 %v1016
    %vm1023 = vweird.f32 %v1017
    %vm1024 = vmor %vm1022, %vm1023
    %v1025 = vsel %vm1024, %v1017, %v1021
    %v1026 = vand.u32 2147483647, %v1016
    %vm1027 = vcmp.eq.f32.partialorder %v1026, 8.507059e+37
    %v1028 = vand.u32 %v1016, 2147483648
    %v1029 = vor.u32 1.1754944e-38, %v1028
    %v1030 = vsel %vm1027, %v1029, %v1025
    %v1031 = vmul.f32 1.0, %v1030
    %v1032 = vtanh.pop %v1012
    %v1033 = vmul.f32 %v1031, %v895
    %1035 = vrot.lane.b32.xlu0 %v1032, 64
    %v1036 = vpop.permute.xlu0 %1035
    %v1038 = vmul.f32 %v1031, %v1036
    %1040 = vrot.lane.b32.xlu0 %v1038, 32
    %v1041 = vpop.permute.xlu0 %1040
    %v1043 = vadd.f32 %v1033, %v1041
    %v1044 = vtanh.pop %v1043
    %1046 = vrot.lane.b32.xlu0 %v1044, 64
    %v1047 = vpop.permute.xlu0 %1046
    %v1049 = vmul.f32 %v1031, %v1047
    %1051 = vrot.lane.b32.xlu0 %v1049, 32
    %v1052 = vpop.permute.xlu0 %1051
    %v1053 = vsel %vm153, %v1052, 0
    %1055 = vmatpush.msra.mxu0 0.0
    %1056 = vmatpush.msra.mxu0 0.0
    %1057 = vmatpush.msra.mxu0 0.0
    %1058 = vmatpush.msra.mxu0 0.0
    %1059 = vmatpush.msra.mxu0 0.0
    %1060 = vmatpush.msra.mxu0 0.0
    %1061 = vmatpush.msra.mxu0 0.0
    %1062 = vmatpush.msra.mxu0 0.0
    %1063 = vmatpush.msra.mxu0 0.0
    %1064 = vmatpush.msra.mxu0 0.0
    %1065 = vmatpush.msra.mxu0 0.0
    %1066 = vmatpush.msra.mxu0 0.0
    %1067 = vmatpush.msra.mxu0 %v142
    %1068 = vmatpush.msra.mxu0 %v141
    %1069 = vmatpush.msra.mxu0 %v140
    %1070 = vmatpush.msra.mxu0 %v139
    %1071 = vmatmul.f32.gmra.mxu0 %v1053
    %v1072 = vpop.f32.mrf.mxu0
    %v1073 = vadd.f32 0.0, %v1072
    %1074 = vdwg.mxu0
    %s1075 = scalar_lea.vmem [#allocation2], 12
    %v1076 = vld [vmem:[%s1075] sm:$0x3]
    %1077 = vmatpush.msra.mxu0 0.0
    %1078 = vmatpush.msra.mxu0 0.0
    %1079 = vmatpush.msra.mxu0 0.0
    %1080 = vmatpush.msra.mxu0 0.0
    %1081 = vmatpush.msra.mxu0 0.0
    %1082 = vmatpush.msra.mxu0 0.0
    %1083 = vmatpush.msra.mxu0 0.0
    %1084 = vmatpush.msra.mxu0 0.0
    %1085 = vmatpush.msra.mxu0 0.0
    %1086 = vmatpush.msra.mxu0 0.0
    %1087 = vmatpush.msra.mxu0 0.0
    %1088 = vmatpush.msra.mxu0 0.0
    %1089 = vmatpush.msra.mxu0 %v134
    %1090 = vmatpush.msra.mxu0 %v133
    %1091 = vmatpush.msra.mxu0 %v132
    %1092 = vmatpush.msra.mxu0 %v131
    %1093 = vmatmul.f32.gmra.mxu0 %v990
    %v1094 = vpop.f32.mrf.mxu0
    %v1095 = vadd.f32 0.0, %v1094
    %1096 = vdwg.mxu0
    %v1097 = vadd.f32 %v1076, %v1095
    %v1098 = vxor.u32 %v1097, 2147483648
    %v1099 = vmul.f32 %v1098, 1.442695
    %v1100 = vpow.pop %v1099
    %v1101 = vadd.f32 %v1100, 1.0
    %v1102 = vrcp.pop %v1101
    %v1103 = vmul.f32 %v1101, %v1102
    %v1104 = vsub.f32 1.0, %v1103
    %v1105 = vmul.f32 %v1102, %v1104
    %v1106 = vadd.f32 %v1102, %v1105
    %vm1107 = vweird.f32 %v1101
    %vm1108 = vweird.f32 %v1102
    %vm1109 = vmor %vm1107, %vm1108
    %v1110 = vsel %vm1109, %v1102, %v1106
    %v1111 = vand.u32 2147483647, %v1101
    %vm1112 = vcmp.eq.f32.partialorder %v1111, 8.507059e+37
    %v1113 = vand.u32 %v1101, 2147483648
    %v1114 = vor.u32 1.1754944e-38, %v1113
    %v1115 = vsel %vm1112, %v1114, %v1110
    %v1116 = vmul.f32 1.0, %v1115
    %v1117 = vtanh.pop %v1097
    %v1118 = vmul.f32 %v1116, %v980
    %1120 = vrot.lane.b32.xlu0 %v1117, 64
    %v1121 = vpop.permute.xlu0 %1120
    %v1123 = vmul.f32 %v1116, %v1121
    %1125 = vrot.lane.b32.xlu0 %v1123, 32
    %v1126 = vpop.permute.xlu0 %1125
    %v1128 = vadd.f32 %v1118, %v1126
    %v1129 = vtanh.pop %v1128
    %1131 = vrot.lane.b32.xlu0 %v1129, 64
    %v1132 = vpop.permute.xlu0 %1131
    %v1134 = vmul.f32 %v1116, %v1132
    %1136 = vrot.lane.b32.xlu0 %v1134, 32
    %v1137 = vpop.permute.xlu0 %1136
    %v1138 = vsel %vm153, %v1137, 0
    %1140 = vmatpush.msra.mxu0 0.0
    %1141 = vmatpush.msra.mxu0 0.0
    %1142 = vmatpush.msra.mxu0 0.0
    %1143 = vmatpush.msra.mxu0 0.0
    %1144 = vmatpush.msra.mxu0 0.0
    %1145 = vmatpush.msra.mxu0 0.0
    %1146 = vmatpush.msra.mxu0 0.0
    %1147 = vmatpush.msra.mxu0 0.0
    %1148 = vmatpush.msra.mxu0 0.0
    %1149 = vmatpush.msra.mxu0 0.0
    %1150 = vmatpush.msra.mxu0 0.0
    %1151 = vmatpush.msra.mxu0 0.0
    %1152 = vmatpush.msra.mxu0 %v138
    %1153 = vmatpush.msra.mxu0 %v137
    %1154 = vmatpush.msra.mxu0 %v136
    %1155 = vmatpush.msra.mxu0 %v135
    %1156 = vmatmul.f32.gmra.mxu0 %v1138
    %v1157 = vpop.f32.mrf.mxu0
    %v1158 = vadd.f32 %v1073, %v1157
    %1159 = vdwg.mxu0
    %v1160 = vadd.f32 %v1158, %v145
    %v1161 = vxor.u32 %v1160, 2147483648
    %v1162 = vmul.f32 %v1161, 1.442695
    %v1163 = vpow.pop %v1162
    %v1164 = vadd.f32 %v1163, 1.0
    %v1165 = vrcp.pop %v1164
    %v1166 = vmul.f32 %v1164, %v1165
    %v1167 = vsub.f32 1.0, %v1166
    %v1168 = vmul.f32 %v1165, %v1167
    %v1169 = vadd.f32 %v1165, %v1168
    %vm1170 = vweird.f32 %v1164
    %vm1171 = vweird.f32 %v1165
    %vm1172 = vmor %vm1170, %vm1171
    %v1173 = vsel %vm1172, %v1165, %v1169
    %v1174 = vand.u32 2147483647, %v1164
    %vm1175 = vcmp.eq.f32.partialorder %v1174, 8.507059e+37
    %v1176 = vand.u32 %v1164, 2147483648
    %v1177 = vor.u32 1.1754944e-38, %v1176
    %v1178 = vsel %vm1175, %v1177, %v1173
    %v1179 = vmul.f32 1.0, %v1178
    %v1180 = vtanh.pop %v1160
    %v1181 = vmul.f32 %v1179, %v1043
    %1183 = vrot.lane.b32.xlu0 %v1180, 64
    %v1184 = vpop.permute.xlu0 %1183
    %v1186 = vmul.f32 %v1179, %v1184
    %1188 = vrot.lane.b32.xlu0 %v1186, 32
    %v1189 = vpop.permute.xlu0 %1188
    %v1191 = vadd.f32 %v1181, %v1189
    %v1192 = vtanh.pop %v1191
    %1194 = vrot.lane.b32.xlu0 %v1192, 64
    %v1195 = vpop.permute.xlu0 %1194
    %v1197 = vmul.f32 %v1179, %v1195
    %1199 = vrot.lane.b32.xlu0 %v1197, 32
    %v1200 = vpop.permute.xlu0 %1199
    %v1201 = vsel %vm153, %v1200, 0
    %1203 = vmatpush.msra.mxu0 0.0
    %1204 = vmatpush.msra.mxu0 0.0
    %1205 = vmatpush.msra.mxu0 0.0
    %1206 = vmatpush.msra.mxu0 0.0
    %1207 = vmatpush.msra.mxu0 0.0
    %1208 = vmatpush.msra.mxu0 0.0
    %1209 = vmatpush.msra.mxu0 0.0
    %1210 = vmatpush.msra.mxu0 0.0
    %1211 = vmatpush.msra.mxu0 0.0
    %1212 = vmatpush.msra.mxu0 0.0
    %1213 = vmatpush.msra.mxu0 0.0
    %1214 = vmatpush.msra.mxu0 0.0
    %1215 = vmatpush.msra.mxu0 %v142
    %1216 = vmatpush.msra.mxu0 %v141
    %1217 = vmatpush.msra.mxu0 %v140
    %1218 = vmatpush.msra.mxu0 %v139
    %1219 = vmatmul.f32.gmra.mxu0 %v1201
    %v1220 = vpop.f32.mrf.mxu0
    %v1221 = vadd.f32 0.0, %v1220
    %1222 = vdwg.mxu0
    %s1223 = scalar_lea.vmem [#allocation2], 14
    %v1224 = vld [vmem:[%s1223] sm:$0x3]
    %1225 = vmatpush.msra.mxu0 0.0
    %1226 = vmatpush.msra.mxu0 0.0
    %1227 = vmatpush.msra.mxu0 0.0
    %1228 = vmatpush.msra.mxu0 0.0
    %1229 = vmatpush.msra.mxu0 0.0
    %1230 = vmatpush.msra.mxu0 0.0
    %1231 = vmatpush.msra.mxu0 0.0
    %1232 = vmatpush.msra.mxu0 0.0
    %1233 = vmatpush.msra.mxu0 0.0
    %1234 = vmatpush.msra.mxu0 0.0
    %1235 = vmatpush.msra.mxu0 0.0
    %1236 = vmatpush.msra.mxu0 0.0
    %1237 = vmatpush.msra.mxu0 %v134
    %1238 = vmatpush.msra.mxu0 %v133
    %1239 = vmatpush.msra.mxu0 %v132
    %1240 = vmatpush.msra.mxu0 %v131
    %1241 = vmatmul.f32.gmra.mxu0 %v1138
    %v1242 = vpop.f32.mrf.mxu0
    %v1243 = vadd.f32 0.0, %v1242
    %1244 = vdwg.mxu0
    %v1245 = vadd.f32 %v1224, %v1243
    %v1246 = vxor.u32 %v1245, 2147483648
    %v1247 = vmul.f32 %v1246, 1.442695
    %v1248 = vpow.pop %v1247
    %v1249 = vadd.f32 %v1248, 1.0
    %v1250 = vrcp.pop %v1249
    %v1251 = vmul.f32 %v1249, %v1250
    %v1252 = vsub.f32 1.0, %v1251
    %v1253 = vmul.f32 %v1250, %v1252
    %v1254 = vadd.f32 %v1250, %v1253
    %vm1255 = vweird.f32 %v1249
    %vm1256 = vweird.f32 %v1250
    %vm1257 = vmor %vm1255, %vm1256
    %v1258 = vsel %vm1257, %v1250, %v1254
    %v1259 = vand.u32 2147483647, %v1249
    %vm1260 = vcmp.eq.f32.partialorder %v1259, 8.507059e+37
    %v1261 = vand.u32 %v1249, 2147483648
    %v1262 = vor.u32 1.1754944e-38, %v1261
    %v1263 = vsel %vm1260, %v1262, %v1258
    %v1264 = vmul.f32 1.0, %v1263
    %v1265 = vtanh.pop %v1245
    %v1266 = vmul.f32 %v1264, %v1128
    %1268 = vrot.lane.b32.xlu0 %v1265, 64
    %v1269 = vpop.permute.xlu0 %1268
    %v1271 = vmul.f32 %v1264, %v1269
    %1273 = vrot.lane.b32.xlu0 %v1271, 32
    %v1274 = vpop.permute.xlu0 %1273
    %v1276 = vadd.f32 %v1266, %v1274
    %v1277 = vtanh.pop %v1276
    %1279 = vrot.lane.b32.xlu0 %v1277, 64
    %v1280 = vpop.permute.xlu0 %1279
    %v1282 = vmul.f32 %v1264, %v1280
    %1284 = vrot.lane.b32.xlu0 %v1282, 32
    %v1285 = vpop.permute.xlu0 %1284
    %v1286 = vsel %vm153, %v1285, 0
    %1288 = vmatpush.msra.mxu0 0.0
    %1289 = vmatpush.msra.mxu0 0.0
    %1290 = vmatpush.msra.mxu0 0.0
    %1291 = vmatpush.msra.mxu0 0.0
    %1292 = vmatpush.msra.mxu0 0.0
    %1293 = vmatpush.msra.mxu0 0.0
    %1294 = vmatpush.msra.mxu0 0.0
    %1295 = vmatpush.msra.mxu0 0.0
    %1296 = vmatpush.msra.mxu0 0.0
    %1297 = vmatpush.msra.mxu0 0.0
    %1298 = vmatpush.msra.mxu0 0.0
    %1299 = vmatpush.msra.mxu0 0.0
    %1300 = vmatpush.msra.mxu0 %v138
    %1301 = vmatpush.msra.mxu0 %v137
    %1302 = vmatpush.msra.mxu0 %v136
    %1303 = vmatpush.msra.mxu0 %v135
    %1304 = vmatmul.f32.gmra.mxu0 %v1286
    %v1305 = vpop.f32.mrf.mxu0
    %v1306 = vadd.f32 %v1221, %v1305
    %1307 = vdwg.mxu0
    %v1308 = vadd.f32 %v1306, %v145
    %v1309 = vxor.u32 %v1308, 2147483648
    %v1310 = vmul.f32 %v1309, 1.442695
    %v1311 = vpow.pop %v1310
    %v1312 = vadd.f32 %v1311, 1.0
    %v1313 = vrcp.pop %v1312
    %v1314 = vmul.f32 %v1312, %v1313
    %v1315 = vsub.f32 1.0, %v1314
    %v1316 = vmul.f32 %v1313, %v1315
    %v1317 = vadd.f32 %v1313, %v1316
    %vm1318 = vweird.f32 %v1312
    %vm1319 = vweird.f32 %v1313
    %vm1320 = vmor %vm1318, %vm1319
    %v1321 = vsel %vm1320, %v1313, %v1317
    %v1322 = vand.u32 2147483647, %v1312
    %vm1323 = vcmp.eq.f32.partialorder %v1322, 8.507059e+37
    %v1324 = vand.u32 %v1312, 2147483648
    %v1325 = vor.u32 1.1754944e-38, %v1324
    %v1326 = vsel %vm1323, %v1325, %v1321
    %v1327 = vmul.f32 1.0, %v1326
    %v1328 = vtanh.pop %v1308
    %v1329 = vmul.f32 %v1327, %v1191
    %1331 = vrot.lane.b32.xlu0 %v1328, 64
    %v1332 = vpop.permute.xlu0 %1331
    %v1334 = vmul.f32 %v1327, %v1332
    %1336 = vrot.lane.b32.xlu0 %v1334, 32
    %v1337 = vpop.permute.xlu0 %1336
    %v1339 = vadd.f32 %v1329, %v1337
    %v1340 = vtanh.pop %v1339
    %1342 = vrot.lane.b32.xlu0 %v1340, 64
    %v1343 = vpop.permute.xlu0 %1342
    %v1345 = vmul.f32 %v1327, %v1343
    %v1346 = vrot.slane %v457, 6
    %v1348 = vrot.slane %v605, 4
    %v1350 = vrot.slane %v753, 2
    %v1352 = vrot.slane %v1049, 6
    %v1354 = vrot.slane %v1197, 4
    %v1357 = vrot.slane %v1345, 2
    %vm1359 = vcmask 1041408
    %v1360 = vsel %vm1359, %v309, %v1346
    %vm1361 = vcmask 1043456
    %v1362 = vsel %vm1361, %v1360, %v1348
    %vm1363 = vcmask 1045504
    %v1364 = vsel %vm1363, %v1362, %v1350
    %v1365 = vsel %vm1359, %v901, %v1352
    %v1366 = vsel %vm1361, %v1365, %v1354
    %v1367 = vsel %vm1363, %v1366, %v1357
    %v1368 = vld [vmem:[#allocation10] sm:$0xff]
    %v1369 = vld [vmem:[#allocation10 + $0x8] sm:$0xff]
    %v1370 = vld [vmem:[#allocation10 + $0x10] sm:$0xff]
    %v1371 = vld [vmem:[#allocation10 + $0x18] sm:$0xff]
    %v1372 = vld [vmem:[%s6] sm:$0x1]
    %v1374 = vperm.slane %v1372, 0
    %1378 = vrot.lane.b32.xlu0 %v1364, 32
    %v1379 = vpop.permute.xlu0 %1378
    %1380 = vrot.lane.b32.xlu0 %v1367, 32
    %v1381 = vpop.permute.xlu0 %1380
    %v1382 = vsel %vm153, %v1379, 0
    %v1384 = vsel %vm153, %v1381, 0
    %1386 = vmatpush.msra.mxu0 0.0
    %1387 = vmatpush.msra.mxu0 0.0
    %1388 = vmatpush.msra.mxu0 0.0
    %1389 = vmatpush.msra.mxu0 0.0
    %1390 = vmatpush.msra.mxu0 0.0
    %1391 = vmatpush.msra.mxu0 0.0
    %1392 = vmatpush.msra.mxu0 0.0
    %1393 = vmatpush.msra.mxu0 0.0
    %1394 = vmatpush.msra.mxu0 0.0
    %1395 = vmatpush.msra.mxu0 0.0
    %1396 = vmatpush.msra.mxu0 0.0
    %1397 = vmatpush.msra.mxu0 0.0
    %1398 = vmatpush.msra.mxu0 %v1371
    %1399 = vmatpush.msra.mxu0 %v1370
    %1400 = vmatpush.msra.mxu0 %v1369
    %1401 = vmatpush.msra.mxu0 %v1368
    %1402 = vmatmul.f32.gmra.mxu0 %v1382
    %v1403 = vpop.f32.mrf.mxu0
    %v1404 = vadd.f32 %v1374, %v1403
    %1405 = vmatmul.f32.gmra.mxu0 %v1384
    %v1406 = vpop.f32.mrf.mxu0
    %v1407 = vadd.f32 %v1374, %v1406
    %1408 = vdwg.mxu0
    %1409 = vst [vmem:[#allocation13] sm:$0xff] %v1404
    %1410 = vst [vmem:[#allocation13 + $0x8] sm:$0xff] %v1407
    %vm1412 = vcmask 254976
    %1413 = vst.msk [vmem:[#allocation14] sm:$0x3] %vm1412, %v1285
    %1414 = vrot.lane.b32.xlu0 %v1345, 32
    %v1415 = vpop.permute.xlu0 %1414
    %s1417 = scalar_lea.vmem [#allocation14], 2
    %1418 = vst.msk [vmem:[%s1417] sm:$0x3] %vm1412, %v1415
    %1420 = vrot.lane.b32.xlu0 %v1276, 96
    %v1421 = vpop.permute.xlu0 %1420
    %1423 = vst.msk [vmem:[#allocation16] sm:$0x3] %vm1412, %v1421
    %1425 = vrot.lane.b32.xlu0 %v1339, 96
    %v1426 = vpop.permute.xlu0 %1425
    %s1428 = scalar_lea.vmem [#allocation16], 2
    %1429 = vst.msk [vmem:[%s1428] sm:$0x3] %vm1412, %v1426
    // Predicated region
    $region62: #{tpu_custom_call.1} parent=1 // pred_check
      _
    $region63: #{tpu_custom_call.1} parent=1 // pred_check_branch
      %1431 = sbr.rel (0) target = $region65
    $region64: #{tpu_custom_call.1} parent=1 // pred_region
      %1433 = vsyncadd [#allocation4], 0
      %s1434 = sshll.u32 [#allocation13], 4
      %s1435 = int_to_ptr.vmem [resolvable:$true] %s1434
      %s1436 = sshll.u32 %s9, 4
      %s1437 = int_to_ptr.hbm [resolvable:$true] %s1436
      %1442 = dma.vmem_to_hbm [thread:$0]  %s1435, 256, %s1437, [#allocation4], 128, 128, 8
    $region65: #{tpu_custom_call.1} parent=1 // pred_fallthru
      _
    // Predicated region
    $region66: #{tpu_custom_call.1} parent=1 // pred_check
      _
    $region67: #{tpu_custom_call.1} parent=1 // pred_check_branch
      %1444 = sbr.rel (0) target = $region69
    $region68: #{tpu_custom_call.1} parent=1 // pred_region
      %1446 = vsyncadd [#allocation15], 0
      %s1447 = sshll.u32 [#allocation14], 4
      %s1448 = int_to_ptr.vmem [resolvable:$true] %s1447
      %s1449 = sshll.u32 %s10, 4
      %s1450 = int_to_ptr.hbm [resolvable:$true] %s1449
      %1455 = dma.vmem_to_hbm [thread:$0]  %s1448, 64, %s1450, [#allocation15], 32, 32, 2
    $region69: #{tpu_custom_call.1} parent=1 // pred_fallthru
      _
    // Predicated region
    $region70: #{tpu_custom_call.1} parent=1 // pred_check
      _
    $region71: #{tpu_custom_call.1} parent=1 // pred_check_branch
      %1457 = sbr.rel (0) target = $region73
    $region72: #{tpu_custom_call.1} parent=1 // pred_region
      %1459 = vsyncadd [#allocation15], 0
      %s1460 = sshll.u32 [#allocation16], 4
      %s1461 = int_to_ptr.vmem [resolvable:$true] %s1460
      %s1462 = sshll.u32 %s11, 4
      %s1463 = int_to_ptr.hbm [resolvable:$true] %s1462
      %1468 = dma.vmem_to_hbm [thread:$0]  %s1461, 64, %s1463, [#allocation15], 32, 32, 2
    $region73: #{tpu_custom_call.1} parent=1 // pred_fallthru
      _
    // Predicated region
    $region74: #{tpu_custom_call.1} parent=1 // pred_check
      _
    $region75: #{tpu_custom_call.1} parent=1 // pred_check_branch
      %1470 = sbr.rel (0) target = $region77
    $region76: #{tpu_custom_call.1} parent=1 // pred_region
      %1472 = dma.done [#allocation4], 256
    $region77: #{tpu_custom_call.1} parent=1 // pred_fallthru
      _
    // Predicated region
    $region78: #{tpu_custom_call.1} parent=1 // pred_check
      _
    $region79: #{tpu_custom_call.1} parent=1 // pred_check_branch
      %1474 = sbr.rel (0) target = $region81
    $region80: #{tpu_custom_call.1} parent=1 // pred_region
      %1476 = dma.done [#allocation15], 64
    $region81: #{tpu_custom_call.1} parent=1 // pred_fallthru
      _
    // Predicated region
    $region82: #{tpu_custom_call.1} parent=1 // pred_check
      _
    $region83: #{tpu_custom_call.1} parent=1 // pred_check_branch
      %1478 = sbr.rel (0) target = $region85
    $region84: #{tpu_custom_call.1} parent=1 // pred_region
      %1480 = dma.done [#allocation15], 64
    $region85: #{tpu_custom_call.1} parent=1 // pred_fallthru
      _
    %1481 = vsyncpa [#allocation3], 1
    %1482 = vsyncpa [#allocation6], 1
    %1483 = vsyncpa [#allocation9], 1
    %1484 = vsyncpa [#allocation12], 1
    %1485 = vsyncpa [#allocation4], 1
    %1486 = vsyncpa [#allocation15], 1

</llo_original>
